<compile_context>
chip_gen: v6e
topology: v6e:2x2x1
jax: 0.10.0
libtpu: 0.0.40
codegen_flags: <defaults>
</compile_context>

<pallas_src>
import jax
import jax.numpy as jnp
from jax.experimental import pallas as pl
from jax.experimental.pallas import tpu as pltpu

IN_DIM = 100
HID = 1200
HID_PAD = 1280          # next multiple of 128 (zero padded; padded slabs are 0)
TK = 256                # K-tile of the padded hidden dim (HID_PAD // TK = 5 steps)
OUT_DIM = 8 * 8 * 3     # 192


def _gendos_kernel(x_ref, w1_ref, b1_ref, w2_ref, b2_ref, w3_ref, b3_ref,
                   out_ref, acc_ref):
    k = pl.program_id(1)

    @pl.when(k == 0)
    def _init():
        acc_ref[...] = jnp.zeros_like(acc_ref)

    # fc1 slab for this K chunk: (TB, TK), bf16 inputs, f32 accumulate, ReLU.
    x_bf16 = x_ref[...].astype(jnp.bfloat16)
    h1_k = jnp.dot(x_bf16, w1_ref[...], preferred_element_type=jnp.float32)
    h1_k = jnp.maximum(h1_k + b1_ref[...], 0.0)

    # fc2 partial accumulation over this K chunk: (TB, HID) += (TB,TK)@(TK,HID)
    acc_ref[...] += jnp.dot(h1_k.astype(jnp.bfloat16), w2_ref[...],
                            preferred_element_type=jnp.float32)

    @pl.when(k == pl.num_programs(1) - 1)
    def _epilogue():
        h2 = jax.nn.sigmoid(acc_ref[...] + b2_ref[...])
        out = jnp.dot(h2.astype(jnp.bfloat16), w3_ref[...],
                      preferred_element_type=jnp.float32) + b3_ref[...]
        out_ref[...] = out.astype(out_ref.dtype)


def prepare_params(params):
    """One-time prep: cast weights to bf16, zero-pad the HID axis to HID_PAD."""
    w1, b1, w2, b2, w3, b3 = params
    pad = HID_PAD - HID
    w1p = jnp.pad(w1, ((0, 0), (0, pad))).astype(jnp.bfloat16)   # (100, 1280)
    b1p = jnp.pad(b1, ((0, 0), (0, pad)))                        # (1, 1280) f32
    w2p = jnp.pad(w2, ((0, pad), (0, 0))).astype(jnp.bfloat16)   # (1280, 1200)
    w3p = w3.astype(jnp.bfloat16)                                # (1200, 192)
    return (w1p, b1p, w2p, b2, w3p, b3)


def gendos_forward(x, prepared_params):
    """x: (B, 100) float32.  Returns (B, 3, 8, 8) float32 (NCHW)."""
    w1p, b1p, w2p, b2, w3p, b3 = prepared_params
    B = x.shape[0]

    TB = B if B <= 256 else 256
    nb = pl.cdiv(B, TB)
    nk = HID_PAD // TK

    grid_spec = pltpu.PrefetchScalarGridSpec(
        num_scalar_prefetch=0,
        grid=(nb, nk),
        in_specs=[
            pl.BlockSpec((TB, IN_DIM), lambda b, k: (b, 0)),      # x
            pl.BlockSpec((IN_DIM, TK), lambda b, k: (0, k)),      # w1 slab
            pl.BlockSpec((1, TK), lambda b, k: (0, k)),           # b1 slab
            pl.BlockSpec((TK, HID), lambda b, k: (k, 0)),         # w2 slab
            pl.BlockSpec((1, HID), lambda b, k: (0, 0)),          # b2 (resident)
            pl.BlockSpec((HID, OUT_DIM), lambda b, k: (0, 0)),    # w3 (resident)
            pl.BlockSpec((1, OUT_DIM), lambda b, k: (0, 0)),      # b3 (resident)
        ],
        out_specs=pl.BlockSpec((TB, OUT_DIM), lambda b, k: (b, 0)),
        scratch_shapes=[pltpu.VMEM((TB, HID), jnp.float32)],      # fc2 accumulator
    )

    out_flat = pl.pallas_call(
        _gendos_kernel,
        out_shape=jax.ShapeDtypeStruct((B, OUT_DIM), jnp.float32),
        grid_spec=grid_spec,
        compiler_params=pltpu.CompilerParams(
            dimension_semantics=("parallel", "arbitrary"),
            vmem_limit_bytes=32 << 20,
        ),
    )(x, w1p, b1p, w2p, b2, w3p, b3)

    # torch: x.view(-1, 3, 8, 8) -> same row-major reshape
    return out_flat.reshape(B, 3, 8, 8)


def init_params(key):
    """Deterministic init mimicking PyTorch Linear default U(-1/sqrt(fan_in), +)."""
    ks = jax.random.split(key, 6)

    def linear(kw, kb, fan_in, fan_out):
        bound = 1.0 / jnp.sqrt(jnp.float32(fan_in))
        # weight stored as (in, out) so the kernel does x @ W (torch stores (out, in))
        w = jax.random.uniform(kw, (fan_in, fan_out), jnp.float32, -bound, bound)
        b = jax.random.uniform(kb, (1, fan_out), jnp.float32, -bound, bound)
        return w, b

    w1, b1 = linear(ks[0], ks[1], IN_DIM, HID)
    w2, b2 = linear(ks[2], ks[3], HID, HID)
    w3, b3 = linear(ks[4], ks[5], HID, OUT_DIM)
    return (w1, b1, w2, b2, w3, b3)


def reference_forward(x, params):
    w1, b1, w2, b2, w3, b3 = params
    h1 = jnp.maximum(x @ w1 + b1, 0.0)
    h2 = jax.nn.sigmoid(h1 @ w2 + b2)
    out = h2 @ w3 + b3
    return out.reshape(x.shape[0], 3, 8, 8)


if __name__ == "__main__":
    key = jax.random.PRNGKey(0)
    k_x, k_p = jax.random.split(key)

    B = 2
    x = jax.random.normal(k_x, (B, IN_DIM), jnp.float32)  # latent noise vector z
    params = init_params(k_p)
    prepared = prepare_params(params)                     # bf16 cast + pad (once)

    out = gendos_forward(x, prepared)
    out = jax.block_until_ready(out)

    ref = reference_forward(x, params)                    # full f32 reference
    assert out.shape == (B, 3, 8, 8), out.shape
    max_err = float(jnp.max(jnp.abs(out - ref)))
    # bf16 weights/activations in the matmuls -> relaxed tolerance vs f32 reference
    assert jnp.allclose(out, ref, atol=3e-2, rtol=3e-2), max_err

    print("KERNEL_OK")
</pallas_src>

<mosaic_0001>
module attributes {stable_mosaic.version = 11 : i64} {
  func.func @_gendos_kernel(%arg0: i32, %arg1: i32, %arg2: memref<2x100xf32, #tpu.memory_space<vmem>>, %arg3: memref<100x256xbf16, #tpu.memory_space<vmem>>, %arg4: memref<1x256xf32, #tpu.memory_space<vmem>>, %arg5: memref<256x1200xbf16, #tpu.memory_space<vmem>>, %arg6: memref<1x1200xf32, #tpu.memory_space<vmem>>, %arg7: memref<1200x192xbf16, #tpu.memory_space<vmem>>, %arg8: memref<1x192xf32, #tpu.memory_space<vmem>>, %arg9: memref<2x192xf32, #tpu.memory_space<vmem>>, %arg10: memref<2x1200xf32, #tpu.memory_space<vmem>>) attributes {dimension_semantics = [#tpu.dimension_semantics<parallel>, #tpu.dimension_semantics<arbitrary>], iteration_bounds = array<i64: 1, 5>, scalar_prefetch = 0 : i64, scratch_operands = 1 : i64, tpu.core_type = #tpu.core_type<tc>, window_params = [{transform_indices = @transform_0, window_bounds = array<i64: 2, 100>}, {transform_indices = @transform_1, window_bounds = array<i64: 100, 256>}, {transform_indices = @transform_2, window_bounds = array<i64: 1, 256>}, {transform_indices = @transform_3, window_bounds = array<i64: 256, 1200>}, {pipeline_mode = #tpu.pipeline_mode<synchronous>, transform_indices = @transform_4, window_bounds = array<i64: 1, 1200>}, {pipeline_mode = #tpu.pipeline_mode<synchronous>, transform_indices = @transform_5, window_bounds = array<i64: 1200, 192>}, {pipeline_mode = #tpu.pipeline_mode<synchronous>, transform_indices = @transform_6, window_bounds = array<i64: 1, 192>}, {transform_indices = @transform_7, window_bounds = array<i64: 2, 192>}]} {
    %c0_i32 = arith.constant 0 : i32
    %0 = arith.cmpi eq, %arg1, %c0_i32 : i32
    %1 = arith.extui %0 : i1 to i32
    %c0_i32_0 = arith.constant 0 : i32
    %2 = arith.cmpi ne, %1, %c0_i32_0 : i32
    scf.if %2 {
      %cst_15 = arith.constant 0.000000e+00 : f32
      %21 = vector.broadcast %cst_15 : f32 to vector<2x1200xf32>
      %c0_16 = arith.constant 0 : index
      %c0_17 = arith.constant 0 : index
      %22 = vector.load %arg10[%c0_16, %c0_17] : memref<2x1200xf32, #tpu.memory_space<vmem>>, vector<2x1200xf32>
      tpu.vector_store %arg10[%c0_16, %c0_17], %21 {strides = array<i32>} : memref<2x1200xf32, #tpu.memory_space<vmem>>, vector<2x1200xf32>,
    } else {
    }
    %c0 = arith.constant 0 : index
    %c0_1 = arith.constant 0 : index
    %3 = vector.load %arg2[%c0, %c0_1] : memref<2x100xf32, #tpu.memory_space<vmem>>, vector<2x100xf32>
    %4 = arith.truncf %3 : vector<2x100xf32> to vector<2x100xbf16>
    %c0_2 = arith.constant 0 : index
    %c0_3 = arith.constant 0 : index
    %5 = vector.load %arg3[%c0_2, %c0_3] : memref<100x256xbf16, #tpu.memory_space<vmem>>, vector<100x256xbf16>
    %cst = arith.constant dense<0.000000e+00> : vector<2x256xf32>
    %6 = tpu.matmul %4, %5, %cst {dimension_numbers = #tpu.dot_dimension_numbers<[1], [0], [0], [1], [0, 0, 1, 1], [], []>} : vector<2x100xbf16>, vector<100x256xbf16>, vector<2x256xf32> -> vector<2x256xf32>
    %c0_4 = arith.constant 0 : index
    %c0_5 = arith.constant 0 : index
    %7 = vector.load %arg4[%c0_4, %c0_5] : memref<1x256xf32, #tpu.memory_space<vmem>>, vector<1x256xf32>
    %8 = vector.broadcast %7 : vector<1x256xf32> to vector<2x256xf32>
    %9 = arith.addf %6, %8 : vector<2x256xf32>
    %cst_6 = arith.constant 0.000000e+00 : f32
    %10 = vector.broadcast %cst_6 : f32 to vector<2x256xf32>
    %11 = arith.maximumf %9, %10 : vector<2x256xf32>
    %c0_7 = arith.constant 0 : index
    %c0_8 = arith.constant 0 : index
    %12 = vector.load %arg10[%c0_7, %c0_8] : memref<2x1200xf32, #tpu.memory_space<vmem>>, vector<2x1200xf32>
    %13 = arith.truncf %11 : vector<2x256xf32> to vector<2x256xbf16>
    %c0_9 = arith.constant 0 : index
    %c0_10 = arith.constant 0 : index
    %14 = vector.load %arg5[%c0_9, %c0_10] : memref<256x1200xbf16, #tpu.memory_space<vmem>>, vector<256x1200xbf16>
    %cst_11 = arith.constant dense<0.000000e+00> : vector<2x1200xf32>
    %15 = tpu.matmul %13, %14, %cst_11 {dimension_numbers = #tpu.dot_dimension_numbers<[1], [0], [0], [1], [0, 0, 1, 1], [], []>} : vector<2x256xbf16>, vector<256x1200xbf16>, vector<2x1200xf32> -> vector<2x1200xf32>
    %16 = arith.addf %12, %15 : vector<2x1200xf32>
    %c0_12 = arith.constant 0 : index
    %c0_13 = arith.constant 0 : index
    %17 = vector.load %arg10[%c0_12, %c0_13] : memref<2x1200xf32, #tpu.memory_space<vmem>>, vector<2x1200xf32>
    tpu.vector_store %arg10[%c0_12, %c0_13], %16 {strides = array<i32>} : memref<2x1200xf32, #tpu.memory_space<vmem>>, vector<2x1200xf32>,
    %c4_i32 = arith.constant 4 : i32
    %18 = arith.cmpi eq, %arg1, %c4_i32 : i32
    %19 = arith.extui %18 : i1 to i32
    %c0_i32_14 = arith.constant 0 : i32
    %20 = arith.cmpi ne, %19, %c0_i32_14 : i32
    scf.if %20 {
      %c0_15 = arith.constant 0 : index
      %c0_16 = arith.constant 0 : index
      %21 = vector.load %arg10[%c0_15, %c0_16] : memref<2x1200xf32, #tpu.memory_space<vmem>>, vector<2x1200xf32>
      %c0_17 = arith.constant 0 : index
      %c0_18 = arith.constant 0 : index
      %22 = vector.load %arg6[%c0_17, %c0_18] : memref<1x1200xf32, #tpu.memory_space<vmem>>, vector<1x1200xf32>
      %23 = vector.broadcast %22 : vector<1x1200xf32> to vector<2x1200xf32>
      %24 = arith.addf %21, %23 : vector<2x1200xf32>
      %25 = arith.negf %24 : vector<2x1200xf32>
      %26 = math.exp %25 : vector<2x1200xf32>
      %cst_19 = arith.constant 1.000000e+00 : f32
      %27 = vector.broadcast %cst_19 : f32 to vector<2x1200xf32>
      %28 = arith.addf %27, %26 : vector<2x1200xf32>
      %29 = arith.divf %27, %28 : vector<2x1200xf32>
      %30 = arith.truncf %29 : vector<2x1200xf32> to vector<2x1200xbf16>
      %c0_20 = arith.constant 0 : index
      %c0_21 = arith.constant 0 : index
      %31 = vector.load %arg7[%c0_20, %c0_21] : memref<1200x192xbf16, #tpu.memory_space<vmem>>, vector<1200x192xbf16>
      %cst_22 = arith.constant dense<0.000000e+00> : vector<2x192xf32>
      %32 = tpu.matmul %30, %31, %cst_22 {dimension_numbers = #tpu.dot_dimension_numbers<[1], [0], [0], [1], [0, 0, 1, 1], [], []>} : vector<2x1200xbf16>, vector<1200x192xbf16>, vector<2x192xf32> -> vector<2x192xf32>
      %c0_23 = arith.constant 0 : index
      %c0_24 = arith.constant 0 : index
      %33 = vector.load %arg8[%c0_23, %c0_24] : memref<1x192xf32, #tpu.memory_space<vmem>>, vector<1x192xf32>
      %34 = vector.broadcast %33 : vector<1x192xf32> to vector<2x192xf32>
      %35 = arith.addf %32, %34 : vector<2x192xf32>
      %c0_25 = arith.constant 0 : index
      %c0_26 = arith.constant 0 : index
      %36 = vector.load %arg9[%c0_25, %c0_26] : memref<2x192xf32, #tpu.memory_space<vmem>>, vector<2x192xf32>
      tpu.vector_store %arg9[%c0_25, %c0_26], %35 {strides = array<i32>} : memref<2x192xf32, #tpu.memory_space<vmem>>, vector<2x192xf32>,
    } else {
    }
    return
  }
  func.func @transform_0(%arg0: i32, %arg1: i32) -> (i32, i32) {
    %c0_i32 = arith.constant 0 : i32
    %c0_i32_0 = arith.constant 0 : i32
    return %arg0, %c0_i32 : i32, i32
  }
  func.func @transform_1(%arg0: i32, %arg1: i32) -> (i32, i32) {
    %c0_i32 = arith.constant 0 : i32
    %c0_i32_0 = arith.constant 0 : i32
    return %c0_i32, %arg1 : i32, i32
  }
  func.func @transform_2(%arg0: i32, %arg1: i32) -> (i32, i32) {
    %c0_i32 = arith.constant 0 : i32
    %c0_i32_0 = arith.constant 0 : i32
    return %c0_i32, %arg1 : i32, i32
  }
  func.func @transform_3(%arg0: i32, %arg1: i32) -> (i32, i32) {
    %c0_i32 = arith.constant 0 : i32
    %c0_i32_0 = arith.constant 0 : i32
    return %arg1, %c0_i32 : i32, i32
  }
  func.func @transform_4(%arg0: i32, %arg1: i32) -> (i32, i32) {
    %c0_i32 = arith.constant 0 : i32
    %c0_i32_0 = arith.constant 0 : i32
    %c0_i32_1 = arith.constant 0 : i32
    return %c0_i32, %c0_i32_0 : i32, i32
  }
  func.func @transform_5(%arg0: i32, %arg1: i32) -> (i32, i32) {
    %c0_i32 = arith.constant 0 : i32
    %c0_i32_0 = arith.constant 0 : i32
    %c0_i32_1 = arith.constant 0 : i32
    return %c0_i32, %c0_i32_0 : i32, i32
  }
  func.func @transform_6(%arg0: i32, %arg1: i32) -> (i32, i32) {
    %c0_i32 = arith.constant 0 : i32
    %c0_i32_0 = arith.constant 0 : i32
    %c0_i32_1 = arith.constant 0 : i32
    return %c0_i32, %c0_i32_0 : i32, i32
  }
  func.func @transform_7(%arg0: i32, %arg1: i32) -> (i32, i32) {
    %c0_i32 = arith.constant 0 : i32
    %c0_i32_0 = arith.constant 0 : i32
    return %arg0, %c0_i32 : i32, i32
  }
}

</mosaic_0001>

<llo_original>
// kernel: tpu_custom_call.1
$region0: #{tpu_custom_call.1}
  #allocation0 [shape = 'u32[]', space=smem, size = 0x4, offset = 0x4, fixed_abs, tag = 'smem constant byte address 0x4 - core index']
  #allocation1 [shape = 'u32[144,128]{1,0:T(1,128)}', space=vmem, size = 0x12000, scoped, tag = 'internal scratch']
  #allocation2 [shape = 'f32[2,1200]{1,0:T(2,128)}', space=vmem, size = 0x2800, scoped, tag = 'scratch operand']
  %s0 = inlined_call_operand.vmem [shape: f32[2,100], index: 0, kind: input, shape index: {}]
  %s1 = inlined_call_operand.vmem [shape: bf16[100,1280], index: 1, kind: input, shape index: {}]
  %s2 = inlined_call_operand.vmem [shape: f32[1,1280], index: 2, kind: input, shape index: {}]
  %s3 = inlined_call_operand.vmem [shape: bf16[1280,1200], index: 3, kind: input, shape index: {}]
  %s4 = inlined_call_operand.vmem [shape: f32[1,1200], index: 4, kind: input, shape index: {}]
  %s5 = inlined_call_operand.vmem [shape: bf16[1200,192], index: 5, kind: input, shape index: {}]
  %s6 = inlined_call_operand.vmem [shape: f32[1,192], index: 6, kind: input, shape index: {}]
  %s7 = inlined_call_operand.hbm [shape: f32[2,192], index: 7, kind: output, shape index: {}]
  %s8 = sld [smem:[#allocation0]]
  $region107: #{tpu_custom_call.1} parent=0
    _
  %s10 = ssub.s32 1, %s8
  %s11 = scalar_select 0, %s10, %s8
  $region1: #{tpu_custom_call.1} parent=0
    #allocation3 [shape = 'u8[106496]{0}', space=vmem, size = 0x1a000, scoped, tag = 'input window, operand 1']
    #allocation4 [shape = 'u8[2048]{0}', space=vmem, size = 0x800, scoped, tag = 'output window, operand 0, single buffered']
    #allocation5 [shape = 's32[2]{0}', space=sflag, size = 0x8, scoped, tag = 'scoped memory for tpu_custom_call.1']
    %12 = vsyncpa [#allocation5], 0
    loop: start=0, step=1, limit=7
    $region2: #{tpu_custom_call.1} parent=1 // loop_pre_header
      _
    $region3: #{tpu_custom_call.1} parent=1 // loop_header
      %s14 = sphi 0, %s18
      %p15 = scmp.ge.s32.totalorder %s14, 7
      %s21 = sphi 0, %s33
      %s22 = sphi 0, %s29
      %s23 = sphi 0, %s21
      %s24 = sphi 0, %s22
      %s25 = sphi 0, %s23
      %s26 = sphi 0, %s24
      %s36 = sphi 0, %s38
      %s39 = sphi 0, %s36
      %s40 = sphi 0, %s39
      %s56 = sphi 0, %s40
      %s62 = sphi 0, %s64
      %s65 = sphi 0, %s62
      %s66 = sphi 0, %s65
      %s82 = sphi 0, %s66
      %s88 = sphi 0, %s90
      %s91 = sphi 0, %s88
      %s92 = sphi 0, %s91
      %s108 = sphi 0, %s92
      %s114 = sphi 0, %s116
      %s117 = sphi 0, %s114
      %s118 = sphi 0, %s117
      %s134 = sphi 0, %s118
      %s138 = sphi 0, %s138
      %s140 = sphi 0, %s138
      %s141 = sphi 0, %s140
      %s155 = sphi 0, %s141
      %s159 = sphi 0, %s159
      %s161 = sphi 0, %s159
      %s162 = sphi 0, %s161
      %s176 = sphi 0, %s162
      %s180 = sphi 0, %s180
      %s182 = sphi 0, %s180
      %s183 = sphi 0, %s182
      %s197 = sphi 0, %s183
      %s203 = sphi 0, %s205
      %s206 = sphi 0, %s203
      %s207 = sphi 0, %s206
      %s223 = sphi 0, %s207
    $region4: #{tpu_custom_call.1} parent=1 // loop_header_branch
      %17 = sbr.rel (%p15) target = $region8
    $region5: #{tpu_custom_call.1} parent=1 // loop_body
      %s19 = ssub.s32 %s14, 1
      %s20 = ssub.s32 %s14, 2
      %s27 = sadd.s32 1, %s22
      %p28 = scmp.ge.s32.totalorder %s27, 5
      %s29 = scalar_select %p28, 0, %s27
      %s30 = sadd.s32 1, %s21
      %s31 = scalar_select %p28, %s30, %s21
      %p32 = scmp.ge.s32.totalorder %s31, 1
      %s33 = scalar_select %p32, 0, %s31
      %s34 = ssub.s32 %s21, %s33
      %p35 = scmp.eq.s32.totalorder %s34, 0
      %s37 = sadd.s32 %s36, 1
      %s38 = scalar_select %p35, %s36, %s37
      %p41 = pneg %p35
      %p42 = scmp.eq.s32.totalorder %s14, 4
      %p43 = por %p41, %p42
      %p44 = scmp.ne.s32.totalorder %s36, %s39
      %p45 = scmp.eq.s32.totalorder %s14, 0
      %p46 = por %p44, %p45
      %p47 = scmp.ne.s32.totalorder %s36, %s39
      %p48 = scmp.eq.s32.totalorder %s19, 4
      %p49 = por %p47, %p48
      %p50 = scmp.ne.s32.totalorder %s39, %s40
      %p51 = scmp.eq.s32.totalorder %s19, 0
      %p52 = por %p50, %p51
      %p53 = scmp.ne.s32.totalorder %s39, %s40
      %p54 = scmp.eq.s32.totalorder %s20, 4
      %p55 = por %p53, %p54
      %p57 = scmp.ne.s32.totalorder %s40, %s56
      %p58 = scmp.eq.s32.totalorder %s20, 0
      %p59 = por %p57, %p58
      %s60 = ssub.s32 %s22, %s29
      %p61 = scmp.eq.s32.totalorder %s60, 0
      %s63 = sadd.s32 %s62, 1
      %s64 = scalar_select %p61, %s62, %s63
      %p67 = pneg %p61
      %p68 = scmp.eq.s32.totalorder %s14, 4
      %p69 = por %p67, %p68
      %p70 = scmp.ne.s32.totalorder %s62, %s65
      %p71 = scmp.eq.s32.totalorder %s14, 0
      %p72 = por %p70, %p71
      %p73 = scmp.ne.s32.totalorder %s62, %s65
      %p74 = scmp.eq.s32.totalorder %s19, 4
      %p75 = por %p73, %p74
      %p76 = scmp.ne.s32.totalorder %s65, %s66
      %p77 = scmp.eq.s32.totalorder %s19, 0
      %p78 = por %p76, %p77
      %p79 = scmp.ne.s32.totalorder %s65, %s66
      %p80 = scmp.eq.s32.totalorder %s20, 4
      %p81 = por %p79, %p80
      %p83 = scmp.ne.s32.totalorder %s66, %s82
      %p84 = scmp.eq.s32.totalorder %s20, 0
      %p85 = por %p83, %p84
      %s86 = ssub.s32 %s22, %s29
      %p87 = scmp.eq.s32.totalorder %s86, 0
      %s89 = sadd.s32 %s88, 1
      %s90 = scalar_select %p87, %s88, %s89
      %p93 = pneg %p87
      %p94 = scmp.eq.s32.totalorder %s14, 4
      %p95 = por %p93, %p94
      %p96 = scmp.ne.s32.totalorder %s88, %s91
      %p97 = scmp.eq.s32.totalorder %s14, 0
      %p98 = por %p96, %p97
      %p99 = scmp.ne.s32.totalorder %s88, %s91
      %p100 = scmp.eq.s32.totalorder %s19, 4
      %p101 = por %p99, %p100
      %p102 = scmp.ne.s32.totalorder %s91, %s92
      %p103 = scmp.eq.s32.totalorder %s19, 0
      %p104 = por %p102, %p103
      %p105 = scmp.ne.s32.totalorder %s91, %s92
      %p106 = scmp.eq.s32.totalorder %s20, 4
      %p107 = por %p105, %p106
      %p109 = scmp.ne.s32.totalorder %s92, %s108
      %p110 = scmp.eq.s32.totalorder %s20, 0
      %p111 = por %p109, %p110
      %s112 = ssub.s32 %s22, %s29
      %p113 = scmp.eq.s32.totalorder %s112, 0
      %s115 = sadd.s32 %s114, 1
      %s116 = scalar_select %p113, %s114, %s115
      %p119 = pneg %p113
      %p120 = scmp.eq.s32.totalorder %s14, 4
      %p121 = por %p119, %p120
      %p122 = scmp.ne.s32.totalorder %s114, %s117
      %p123 = scmp.eq.s32.totalorder %s14, 0
      %p124 = por %p122, %p123
      %p125 = scmp.ne.s32.totalorder %s114, %s117
      %p126 = scmp.eq.s32.totalorder %s19, 4
      %p127 = por %p125, %p126
      %p128 = scmp.ne.s32.totalorder %s117, %s118
      %p129 = scmp.eq.s32.totalorder %s19, 0
      %p130 = por %p128, %p129
      %p131 = scmp.ne.s32.totalorder %s117, %s118
      %p132 = scmp.eq.s32.totalorder %s20, 4
      %p133 = por %p131, %p132
      %p135 = scmp.ne.s32.totalorder %s118, %s134
      %p136 = scmp.eq.s32.totalorder %s20, 0
      %p137 = por %p135, %p136
      %s139 = sadd.s32 %s138, 1
      %p142 = scmp.eq.s32.totalorder %s14, 4
      %p143 = scmp.ne.s32.totalorder %s138, %s140
      %p144 = scmp.eq.s32.totalorder %s14, 0
      %p145 = por %p143, %p144
      %p146 = scmp.ne.s32.totalorder %s138, %s140
      %p147 = scmp.eq.s32.totalorder %s19, 4
      %p148 = por %p146, %p147
      %p149 = scmp.ne.s32.totalorder %s140, %s141
      %p150 = scmp.eq.s32.totalorder %s19, 0
      %p151 = por %p149, %p150
      %p152 = scmp.ne.s32.totalorder %s140, %s141
      %p153 = scmp.eq.s32.totalorder %s20, 4
      %p154 = por %p152, %p153
      %p156 = scmp.ne.s32.totalorder %s141, %s155
      %p157 = scmp.eq.s32.totalorder %s20, 0
      %p158 = por %p156, %p157
      %s160 = sadd.s32 %s159, 1
      %p163 = scmp.eq.s32.totalorder %s14, 4
      %p164 = scmp.ne.s32.totalorder %s159, %s161
      %p165 = scmp.eq.s32.totalorder %s14, 0
      %p166 = por %p164, %p165
      %p167 = scmp.ne.s32.totalorder %s159, %s161
      %p168 = scmp.eq.s32.totalorder %s19, 4
      %p169 = por %p167, %p168
      %p170 = scmp.ne.s32.totalorder %s161, %s162
      %p171 = scmp.eq.s32.totalorder %s19, 0
      %p172 = por %p170, %p171
      %p173 = scmp.ne.s32.totalorder %s161, %s162
      %p174 = scmp.eq.s32.totalorder %s20, 4
      %p175 = por %p173, %p174
      %p177 = scmp.ne.s32.totalorder %s162, %s176
      %p178 = scmp.eq.s32.totalorder %s20, 0
      %p179 = por %p177, %p178
      %s181 = sadd.s32 %s180, 1
      %p184 = scmp.eq.s32.totalorder %s14, 4
      %p185 = scmp.ne.s32.totalorder %s180, %s182
      %p186 = scmp.eq.s32.totalorder %s14, 0
      %p187 = por %p185, %p186
      %p188 = scmp.ne.s32.totalorder %s180, %s182
      %p189 = scmp.eq.s32.totalorder %s19, 4
      %p190 = por %p188, %p189
      %p191 = scmp.ne.s32.totalorder %s182, %s183
      %p192 = scmp.eq.s32.totalorder %s19, 0
      %p193 = por %p191, %p192
      %p194 = scmp.ne.s32.totalorder %s182, %s183
      %p195 = scmp.eq.s32.totalorder %s20, 4
      %p196 = por %p194, %p195
      %p198 = scmp.ne.s32.totalorder %s183, %s197
      %p199 = scmp.eq.s32.totalorder %s20, 0
      %p200 = por %p198, %p199
      %s201 = ssub.s32 %s21, %s33
      %p202 = scmp.eq.s32.totalorder %s201, 0
      %s204 = sadd.s32 %s203, 1
      %s205 = scalar_select %p202, %s203, %s204
      %p208 = pneg %p202
      %p209 = scmp.eq.s32.totalorder %s14, 4
      %p210 = por %p208, %p209
      %p211 = scmp.ne.s32.totalorder %s203, %s206
      %p212 = scmp.eq.s32.totalorder %s14, 0
      %p213 = por %p211, %p212
      %p214 = scmp.ne.s32.totalorder %s203, %s206
      %p215 = scmp.eq.s32.totalorder %s19, 4
      %p216 = por %p214, %p215
      %p217 = scmp.ne.s32.totalorder %s206, %s207
      %p218 = scmp.eq.s32.totalorder %s19, 0
      %p219 = por %p217, %p218
      %p220 = scmp.ne.s32.totalorder %s206, %s207
      %p221 = scmp.eq.s32.totalorder %s20, 4
      %p222 = por %p220, %p221
      %p224 = scmp.ne.s32.totalorder %s207, %s223
      %p225 = scmp.eq.s32.totalorder %s20, 0
      %p226 = por %p224, %p225
      %p227 = scmp.le.s32.totalorder 1, %s14
      %p228 = scmp.lt.s32.totalorder %s14, 6
      %p229 = pnand %p227, %p228
      %p230 = pneg %p229
      // Predicated region
      $region9: #{tpu_custom_call.1} parent=5 // pred_check
        _
      $region10: #{tpu_custom_call.1} parent=5 // pred_check_branch
        %232 = sbr.rel (%p229) target = $region12
      $region11: #{tpu_custom_call.1} parent=5 // pred_region
        %s233 = ssub.s32 %s14, 1
        // Predicated region
        $region13: #{tpu_custom_call.1} parent=11 // pred_check
          %p234 = pneg %p52
        $region14: #{tpu_custom_call.1} parent=11 // pred_check_branch
          %236 = sbr.rel (%p234) target = $region16
        $region15: #{tpu_custom_call.1} parent=11 // pred_region
          %p237 = scmp.lt.s32.totalorder %s23, 0
          %s238 = scalar_select %p237, %s23, 0
          %s239 = smul.addr %s238, 2
          %s240 = scalar_lea.vmem %s0, %s239
        $region16: #{tpu_custom_call.1} parent=11 // pred_fallthru
          _
        // Predicated region
        $region17: #{tpu_custom_call.1} parent=11 // pred_check
          %p241 = pneg %p151
        $region18: #{tpu_custom_call.1} parent=11 // pred_check_branch
          %243 = sbr.rel (%p241) target = $region20
        $region19: #{tpu_custom_call.1} parent=11 // pred_region
          _
        $region20: #{tpu_custom_call.1} parent=11 // pred_fallthru
          _
        // Predicated region
        $region21: #{tpu_custom_call.1} parent=11 // pred_check
          %p244 = pneg %p172
        $region22: #{tpu_custom_call.1} parent=11 // pred_check_branch
          %246 = sbr.rel (%p244) target = $region24
        $region23: #{tpu_custom_call.1} parent=11 // pred_region
          _
        $region24: #{tpu_custom_call.1} parent=11 // pred_fallthru
          _
        // Predicated region
        $region25: #{tpu_custom_call.1} parent=11 // pred_check
          %p247 = pneg %p193
        $region26: #{tpu_custom_call.1} parent=11 // pred_check_branch
          %249 = sbr.rel (%p247) target = $region28
        $region27: #{tpu_custom_call.1} parent=11 // pred_region
          _
        $region28: #{tpu_custom_call.1} parent=11 // pred_fallthru
          _
      $region12: #{tpu_custom_call.1} parent=5 // pred_fallthru
        _
      %p250 = scmp.lt.s32.totalorder %s14, 5
      // Predicated region
      $region29: #{tpu_custom_call.1} parent=5 // pred_check
        %p251 = pneg %p250
      $region30: #{tpu_custom_call.1} parent=5 // pred_check_branch
        %253 = sbr.rel (%p251) target = $region32
      $region31: #{tpu_custom_call.1} parent=5 // pred_region
        // Predicated region
        $region33: #{tpu_custom_call.1} parent=31 // pred_check
          %p254 = pneg %p72
        $region34: #{tpu_custom_call.1} parent=31 // pred_check_branch
          %256 = sbr.rel (%p254) target = $region36
        $region35: #{tpu_custom_call.1} parent=31 // pred_region
          %s257 = sand.u32 %s62, 1
          %s258 = sand.u32 %s62, 1
          %s259 = smul.addr %s258, 104
          %s260 = scalar_lea.vmem [#allocation3], %s259
          %s261 = smul.u32 2, %s22
          %s262 = smul.addr %s261, 4
          %s263 = scalar_lea.vmem %s1, %s262
          // Predicated region
          $region37: #{tpu_custom_call.1} parent=35 // pred_check
            _
          $region38: #{tpu_custom_call.1} parent=35 // pred_check_branch
            %265 = sbr.rel (0) target = $region40
          $region39: #{tpu_custom_call.1} parent=35 // pred_region
            // Predicated region
            $region41: #{tpu_custom_call.1} parent=39 // pred_check
              _
            $region42: #{tpu_custom_call.1} parent=39 // pred_check_branch
              %267 = sbr.rel (0) target = $region44
            $region43: #{tpu_custom_call.1} parent=39 // pred_region
              // Predicated region
              $region56: #{tpu_custom_call.1} parent=43 // pred_check
                _
              $region57: #{tpu_custom_call.1} parent=43 // pred_check_branch
                %307 = sbr.rel (0) target = $region59
              $region58: #{tpu_custom_call.1} parent=43 // pred_region
                loop: start=0, step=1, limit=1
                $region60: #{tpu_custom_call.1} parent=58 // loop_pre_header
                  _
                $region61: #{tpu_custom_call.1} parent=58 // loop_header
                  %s309 = sphi 0, %s313
                  %p310 = scmp.ge.s32.totalorder %s309, 1
                  %s314 = sphi %s263, %s263
                  %s315 = sphi %s260, %s260
                $region62: #{tpu_custom_call.1} parent=58 // loop_header_branch
                  %312 = sbr.rel (%p310) target = $region66
                $region63: #{tpu_custom_call.1} parent=58 // loop_body
                  %v316 = vld [vmem:[%s314] sm:$0xff]
                  %317 = vst [vmem:[%s315] sm:$0xff] %v316
                  %v318 = vld [vmem:[%s314 + $0x28] sm:$0xff]
                  %319 = vst [vmem:[%s315 + $0x8] sm:$0xff] %v318
                  %v320 = vld [vmem:[%s314 + $0x50] sm:$0xff]
                  %321 = vst [vmem:[%s315 + $0x10] sm:$0xff] %v320
                  %v322 = vld [vmem:[%s314 + $0x78] sm:$0xff]
                  %323 = vst [vmem:[%s315 + $0x18] sm:$0xff] %v322
                  %v324 = vld [vmem:[%s314 + $0xa0] sm:$0xff]
                  %325 = vst [vmem:[%s315 + $0x20] sm:$0xff] %v324
                  %v326 = vld [vmem:[%s314 + $0xc8] sm:$0xff]
                  %327 = vst [vmem:[%s315 + $0x28] sm:$0xff] %v326
                  %v328 = vld [vmem:[%s314 + $0xf0] sm:$0xff]
                  %329 = vst [vmem:[%s315 + $0x30] sm:$0xff] %v328
                  %v330 = vld [vmem:[%s314 + $0x118] sm:$0xff]
                  %331 = vst [vmem:[%s315 + $0x38] sm:$0xff] %v330
                  %v332 = vld [vmem:[%s314 + $0x140] sm:$0xff]
                  %333 = vst [vmem:[%s315 + $0x40] sm:$0xff] %v332
                  %v334 = vld [vmem:[%s314 + $0x168] sm:$0xff]
                  %335 = vst [vmem:[%s315 + $0x48] sm:$0xff] %v334
                  %v336 = vld [vmem:[%s314 + $0x190] sm:$0xff]
                  %337 = vst [vmem:[%s315 + $0x50] sm:$0xff] %v336
                  %v338 = vld [vmem:[%s314 + $0x1b8] sm:$0xff]
                  %339 = vst [vmem:[%s315 + $0x58] sm:$0xff] %v338
                  %v340 = vld [vmem:[%s314 + $0x1e0] sm:$0xff]
                  %341 = vst [vmem:[%s315 + $0x60] sm:$0xff] %v340
                $region64: #{tpu_custom_call.1} parent=58 // loop_footer
                  %s313 = sadd.s32 1, %s309
                $region65: #{tpu_custom_call.1} parent=58 // loop_footer_branch
                  %308 = sbr.rel target = $region61
                $region66: #{tpu_custom_call.1} parent=58 // loop_exit
                  _
              $region59: #{tpu_custom_call.1} parent=43 // pred_fallthru
                _
              // Predicated region
              $region67: #{tpu_custom_call.1} parent=43 // pred_check
                _
              $region68: #{tpu_custom_call.1} parent=43 // pred_check_branch
                %343 = sbr.rel target = $region70
              $region69: #{tpu_custom_call.1} parent=43 // pred_region
                _
              $region70: #{tpu_custom_call.1} parent=43 // pred_fallthru
                _
            $region44: #{tpu_custom_call.1} parent=39 // pred_fallthru
              _
            // Predicated region
            $region45: #{tpu_custom_call.1} parent=39 // pred_check
              _
            $region46: #{tpu_custom_call.1} parent=39 // pred_check_branch
              %269 = sbr.rel target = $region48
            $region47: #{tpu_custom_call.1} parent=39 // pred_region
              %s271 = ssub.s32 256, 1
              loop: start=0, step=1, limit=1
              $region49: #{tpu_custom_call.1} parent=47 // loop_pre_header
                _
              $region50: #{tpu_custom_call.1} parent=47 // loop_header
                %s273 = sphi 0, %s277
                %p274 = scmp.ge.s32.totalorder %s273, 1
                %s278 = sphi %s263, %s263
                %s279 = sphi %s260, %s260
              $region51: #{tpu_custom_call.1} parent=47 // loop_header_branch
                %276 = sbr.rel (%p274) target = $region55
              $region52: #{tpu_custom_call.1} parent=47 // loop_body
                %v280 = vld [vmem:[%s278] sm:%s271]
                %281 = vst [vmem:[%s279] sm:%s271] %v280
                %v282 = vld [vmem:[%s278 + $0x28] sm:%s271]
                %283 = vst [vmem:[%s279 + $0x8] sm:%s271] %v282
                %v284 = vld [vmem:[%s278 + $0x50] sm:%s271]
                %285 = vst [vmem:[%s279 + $0x10] sm:%s271] %v284
                %v286 = vld [vmem:[%s278 + $0x78] sm:%s271]
                %287 = vst [vmem:[%s279 + $0x18] sm:%s271] %v286
                %v288 = vld [vmem:[%s278 + $0xa0] sm:%s271]
                %289 = vst [vmem:[%s279 + $0x20] sm:%s271] %v288
                %v290 = vld [vmem:[%s278 + $0xc8] sm:%s271]
                %291 = vst [vmem:[%s279 + $0x28] sm:%s271] %v290
                %v292 = vld [vmem:[%s278 + $0xf0] sm:%s271]
                %293 = vst [vmem:[%s279 + $0x30] sm:%s271] %v292
                %v294 = vld [vmem:[%s278 + $0x118] sm:%s271]
                %295 = vst [vmem:[%s279 + $0x38] sm:%s271] %v294
                %v296 = vld [vmem:[%s278 + $0x140] sm:%s271]
                %297 = vst [vmem:[%s279 + $0x40] sm:%s271] %v296
                %v298 = vld [vmem:[%s278 + $0x168] sm:%s271]
                %299 = vst [vmem:[%s279 + $0x48] sm:%s271] %v298
                %v300 = vld [vmem:[%s278 + $0x190] sm:%s271]
                %301 = vst [vmem:[%s279 + $0x50] sm:%s271] %v300
                %v302 = vld [vmem:[%s278 + $0x1b8] sm:%s271]
                %303 = vst [vmem:[%s279 + $0x58] sm:%s271] %v302
                %v304 = vld [vmem:[%s278 + $0x1e0] sm:%s271]
                %305 = vst [vmem:[%s279 + $0x60] sm:%s271] %v304
              $region53: #{tpu_custom_call.1} parent=47 // loop_footer
                %s277 = sadd.s32 1, %s273
              $region54: #{tpu_custom_call.1} parent=47 // loop_footer_branch
                %272 = sbr.rel target = $region50
              $region55: #{tpu_custom_call.1} parent=47 // loop_exit
                _
            $region48: #{tpu_custom_call.1} parent=39 // pred_fallthru
              _
          $region40: #{tpu_custom_call.1} parent=35 // pred_fallthru
            _
          %344 = vnop
        $region36: #{tpu_custom_call.1} parent=31 // pred_fallthru
          _
        // Predicated region
        $region71: #{tpu_custom_call.1} parent=31 // pred_check
          %p345 = pneg %p98
        $region72: #{tpu_custom_call.1} parent=31 // pred_check_branch
          %347 = sbr.rel (%p345) target = $region74
        $region73: #{tpu_custom_call.1} parent=31 // pred_region
          %s348 = smul.u32 2, %s22
          %p349 = scmp.lt.s32.totalorder %s348, 9
          %s350 = scalar_select %p349, %s348, 9
          %s351 = scalar_lea.vmem %s2, %s350
          %s352 = smul.u32 2, %s22
        $region74: #{tpu_custom_call.1} parent=31 // pred_fallthru
          _
        // Predicated region
        $region75: #{tpu_custom_call.1} parent=31 // pred_check
          %p353 = pneg %p124
        $region76: #{tpu_custom_call.1} parent=31 // pred_check_branch
          %355 = sbr.rel (%p353) target = $region78
        $region77: #{tpu_custom_call.1} parent=31 // pred_region
          %s356 = smul.u32 32, %s22
          %p357 = scmp.lt.s32.totalorder %s356, 159
          %s358 = scalar_select %p357, %s356, 159
          %s359 = smul.addr %s358, 10
          %s360 = smul.addr %s359, 4
          %s361 = scalar_lea.vmem %s3, %s360
          %s362 = smul.u32 32, %s22
        $region78: #{tpu_custom_call.1} parent=31 // pred_fallthru
          _
      $region32: #{tpu_custom_call.1} parent=5 // pred_fallthru
        _
      %p363 = scmp.le.s32.totalorder 1, %s14
      %p364 = scmp.lt.s32.totalorder %s14, 6
      %p365 = pnand %p363, %p364
      %p366 = pneg %p365
      // Predicated region
      $region79: #{tpu_custom_call.1} parent=5 // pred_check
        _
      $region80: #{tpu_custom_call.1} parent=5 // pred_check_branch
        %368 = sbr.rel (%p365) target = $region82
      $region81: #{tpu_custom_call.1} parent=5 // pred_region
        %s369 = ssub.s32 %s14, 1
        %s370 = sand.u32 %s65, 1
        %s371 = sand.u32 %s65, 1
        %s372 = smul.addr %s371, 104
        %s373 = scalar_lea.vmem [#allocation3], %s372
        // Predicated region
        $region83: #{tpu_custom_call.1} parent=81 // pred_check
          %p374 = pneg %p78
        $region84: #{tpu_custom_call.1} parent=81 // pred_check_branch
          %376 = sbr.rel (%p374) target = $region86
        $region85: #{tpu_custom_call.1} parent=81 // pred_region
          _
        $region86: #{tpu_custom_call.1} parent=81 // pred_fallthru
          _
        %p377 = scmp.lt.s32.totalorder %s23, 0
        %s378 = scalar_select %p377, %s23, 0
        %s379 = smul.addr %s378, 2
        %s380 = scalar_lea.vmem %s0, %s379
        %p381 = pneg %p52
        %p382 = pneg %p49
        %s383 = sand.u32 %s65, 1
        %s384 = sand.u32 %s65, 1
        %s385 = smul.addr %s384, 104
        %s386 = scalar_lea.vmem [#allocation3], %s385
        %p387 = pneg %p78
        %p388 = pneg %p75
        %s389 = smul.u32 2, %s24
        %p390 = scmp.lt.s32.totalorder %s389, 9
        %s391 = scalar_select %p390, %s389, 9
        %s392 = scalar_lea.vmem %s2, %s391
        %p393 = pneg %p104
        %p394 = pneg %p101
        %s395 = smul.u32 32, %s24
        %p396 = scmp.lt.s32.totalorder %s395, 159
        %s397 = scalar_select %p396, %s395, 159
        %s398 = smul.addr %s397, 10
        %s399 = smul.addr %s398, 4
        %s400 = scalar_lea.vmem %s3, %s399
        %p401 = pneg %p130
        %p402 = pneg %p127
        %p403 = pneg %p151
        %p404 = pneg %p148
        %p405 = pneg %p172
        %p406 = pneg %p169
        %p407 = pneg %p193
        %p408 = pneg %p190
        %p409 = pneg %p219
        %p410 = pneg %p216
        %p411 = scmp.lt.s32.totalorder %s23, 0
        %s412 = scalar_select %p411, %s23, 0
        %s413 = smul.addr %s412, 2
        %s414 = scalar_lea.vmem %s0, %s413
        %s415 = smul.u32 2, %s24
        %s416 = smul.u32 2, %s24
        %p417 = scmp.lt.s32.totalorder %s416, 9
        %s418 = scalar_select %p417, %s416, 9
        %s419 = scalar_lea.vmem %s2, %s418
        %s420 = smul.u32 2, %s24
        %s421 = smul.u32 32, %s24
        %p422 = scmp.lt.s32.totalorder %s421, 159
        %s423 = scalar_select %p422, %s421, 159
        %s424 = smul.addr %s423, 10
        %s425 = smul.addr %s424, 4
        %s426 = scalar_lea.vmem %s3, %s425
        %s427 = smul.u32 32, %s24
        %p429 = scmp.eq.s32.totalorder %s24, 0
        // Predicated region
        $region87: #{tpu_custom_call.1} parent=81 // pred_check
          %p430 = pneg %p429
        $region88: #{tpu_custom_call.1} parent=81 // pred_check_branch
          %432 = sbr.rel (%p430) target = $region90
        $region89: #{tpu_custom_call.1} parent=81 // pred_region
          %433 = vst [vmem:[#allocation2] sm:$0xff] 0.0
          %434 = vst [vmem:[#allocation2 + $0x8] sm:$0xff] 0.0
          %vm435 = vcmask 1041408
          %vm436 = vcmask 388098
          %vm437 = vmor %vm436, %vm435
          %438 = vst.msk [vmem:[#allocation2 + $0x10] sm:$0xf] %vm437, 0.0
        $region90: #{tpu_custom_call.1} parent=81 // pred_fallthru
          _
        %v439 = vld [vmem:[%s414] sm:$0x3]
        %v440 = vpack.c.bf16 %v439, %v439
        %v441 = vld [vmem:[%s373] sm:$0xff]
        %v442 = vld [vmem:[%s373 + $0x8] sm:$0xff]
        %v443 = vld [vmem:[%s373 + $0x10] sm:$0xff]
        %v444 = vld [vmem:[%s373 + $0x18] sm:$0xff]
        %v445 = vld [vmem:[%s373 + $0x20] sm:$0xff]
        %v446 = vld [vmem:[%s373 + $0x28] sm:$0xff]
        %v447 = vld [vmem:[%s373 + $0x30] sm:$0xff]
        %v448 = vld [vmem:[%s373 + $0x38] sm:$0xff]
        %v449 = vld [vmem:[%s373 + $0x40] sm:$0xff]
        %v450 = vld [vmem:[%s373 + $0x48] sm:$0xff]
        %v451 = vld [vmem:[%s373 + $0x50] sm:$0xff]
        %v452 = vld [vmem:[%s373 + $0x58] sm:$0xff]
        %v453 = vld [vmem:[%s373 + $0x60] sm:$0x33]
        %v454 = vld [vmem:[%s419] sm:$0x3]
        %v456 = vlaneseq
        %v457 = vshrl.u32 %v456, 7
        %v458 = vsub.s32 0, %v457
        %v459 = vrot.slane %v454, %v458
        %v460 = vlaneseq
        %v461 = vshrl.u32 %v460, 7
        %v462 = vsub.s32 1, %v461
        %v463 = vrot.slane %v454, %v462
        %v479 = vunpack.c.l.b16 %v441
        %v480 = vunpack.c.h.b16 %v441
        %v481 = vunpack.c.l.b16 %v442
        %v482 = vunpack.c.h.b16 %v442
        %v483 = vunpack.c.l.b16 %v443
        %v484 = vunpack.c.h.b16 %v443
        %v485 = vunpack.c.l.b16 %v444
        %v486 = vunpack.c.h.b16 %v444
        %v487 = vunpack.c.l.b16 %v445
        %v488 = vunpack.c.h.b16 %v445
        %v489 = vunpack.c.l.b16 %v446
        %v490 = vunpack.c.h.b16 %v446
        %v491 = vunpack.c.l.b16 %v447
        %v492 = vunpack.c.h.b16 %v447
        %v493 = vunpack.c.l.b16 %v448
        %v494 = vunpack.c.h.b16 %v448
        %v495 = vunpack.c.l.b16 %v449
        %v496 = vunpack.c.h.b16 %v449
        %v497 = vunpack.c.l.b16 %v450
        %v498 = vunpack.c.h.b16 %v450
        %v499 = vunpack.c.l.b16 %v451
        %v500 = vunpack.c.h.b16 %v451
        %v501 = vunpack.c.l.b16 %v452
        %v502 = vunpack.c.h.b16 %v452
        %v503 = vunpack.c.l.b16 %v453
        %v504 = vunpack.c.h.b16 %v453
        %v505 = vpack.c.b16 %v481, %v479
        %v506 = vpack.c.b16 %v482, %v480
        %v507 = vpack.c.b16 %v485, %v483
        %v508 = vpack.c.b16 %v486, %v484
        %v509 = vpack.c.b16 %v489, %v487
        %v510 = vpack.c.b16 %v490, %v488
        %v511 = vpack.c.b16 %v493, %v491
        %v512 = vpack.c.b16 %v494, %v492
        %v513 = vpack.c.b16 %v497, %v495
        %v514 = vpack.c.b16 %v498, %v496
        %v515 = vpack.c.b16 %v501, %v499
        %v516 = vpack.c.b16 %v502, %v500
        %v517 = vpack.c.b16 %v503, %v503
        %v518 = vpack.c.b16 %v504, %v504
        %vm531 = vcmask 818176
        %v533 = vsel %vm531, %v440, 0
        %vm535 = vcmask 1041408
        %v537 = vsel %vm535, %v517, 0
        %v540 = vsel %vm535, %v518, 0
        %542 = vmatprep.subr.bf16.mxu0 0
        %543 = vmatpush1.bf16.msra.mxu0 0
        %544 = vmatprep.subr.bf16.mxu0 %v540
        %545 = vmatpush1.bf16.msra.mxu0 %v537
        %546 = vmatprep.subr.bf16.mxu0 %v516
        %547 = vmatpush1.bf16.msra.mxu0 %v515
        %548 = vmatprep.subr.bf16.mxu0 %v514
        %549 = vmatpush1.bf16.msra.mxu0 %v513
        %550 = vmatprep.subr.bf16.mxu0 %v512
        %551 = vmatpush1.bf16.msra.mxu0 %v511
        %552 = vmatprep.subr.bf16.mxu0 %v510
        %553 = vmatpush1.bf16.msra.mxu0 %v509
        %554 = vmatprep.subr.bf16.mxu0 %v508
        %555 = vmatpush1.bf16.msra.mxu0 %v507
        %556 = vmatprep.subr.bf16.mxu0 %v506
        %557 = vmatpush1.bf16.msra.mxu0 %v505
        %558 = vmatprep.subr.bf16.mxu0 0
        %559 = vmatpush2.bf16.msra.mxu0 0
        %560 = vmatprep.subr.bf16.mxu0 0
        %561 = vmatpush2.bf16.msra.mxu0 0
        %562 = vmatprep.subr.bf16.mxu0 0
        %563 = vmatpush2.bf16.msra.mxu0 0
        %564 = vmatprep.subr.bf16.mxu0 0
        %565 = vmatpush2.bf16.msra.mxu0 0
        %566 = vmatprep.subr.bf16.mxu0 0
        %567 = vmatpush2.bf16.msra.mxu0 0
        %568 = vmatprep.subr.bf16.mxu0 0
        %569 = vmatpush2.bf16.msra.mxu0 0
        %570 = vmatprep.subr.bf16.mxu0 0
        %571 = vmatpush2.bf16.msra.mxu0 0
        %572 = vmatprep.subr.bf16.mxu0 0
        %573 = vmatpush2.bf16.msra.mxu0 0
        %574 = vmatprep.mubr.bf16.mxu0 0
        %575 = vmatmul.mubr.bf16.gmra.mxu0 %v533
        %v576 = vpop.f32.mrf.mxu0
        %v577 = vadd.f32 %v459, %v576
        %v578 = vpop.f32.mrf.mxu0
        %v579 = vadd.f32 %v463, %v578
        %v580 = vpop.f32.mrf.mxu0
        %v581 = vpop.f32.mrf.mxu0
        %582 = vdwg.mxu0
        %v583 = vmax.f32 %v577, 0.0
        %v584 = vmax.f32 %v579, 0.0
        %v585 = vld [vmem:[#allocation2] sm:$0xff]
        %v586 = vld [vmem:[#allocation2 + $0x8] sm:$0xff]
        %v587 = vld [vmem:[#allocation2 + $0x10] sm:$0xf]
        %v588 = vpack.c.bf16 %v583, %v583
        %v589 = vpack.c.bf16 %v584, %v584
        %v590 = vld [vmem:[%s426] sm:$0xff]
        %v591 = vld [vmem:[%s426 + $0x8] sm:$0xff]
        %v592 = vld [vmem:[%s426 + $0x10] sm:$0xff]
        %v593 = vld [vmem:[%s426 + $0x18] sm:$0xff]
        %v594 = vld [vmem:[%s426 + $0x20] sm:$0xff]
        %v595 = vld [vmem:[%s426 + $0x28] sm:$0xff]
        %v596 = vld [vmem:[%s426 + $0x30] sm:$0xff]
        %v597 = vld [vmem:[%s426 + $0x38] sm:$0xff]
        %v598 = vld [vmem:[%s426 + $0x40] sm:$0xff]
        %v599 = vld [vmem:[%s426 + $0x48] sm:$0xff]
        %v600 = vld [vmem:[%s426 + $0x50] sm:$0xff]
        %v601 = vld [vmem:[%s426 + $0x58] sm:$0xff]
        %v602 = vld [vmem:[%s426 + $0x60] sm:$0xff]
        %v603 = vld [vmem:[%s426 + $0x68] sm:$0xff]
        %v604 = vld [vmem:[%s426 + $0x70] sm:$0xff]
        %v605 = vld [vmem:[%s426 + $0x78] sm:$0xff]
        %v606 = vld [vmem:[%s426 + $0x80] sm:$0xff]
        %v607 = vld [vmem:[%s426 + $0x88] sm:$0xff]
        %v608 = vld [vmem:[%s426 + $0x90] sm:$0xff]
        %v609 = vld [vmem:[%s426 + $0x98] sm:$0xff]
        %v610 = vld [vmem:[%s426 + $0xa0] sm:$0xff]
        %v611 = vld [vmem:[%s426 + $0xa8] sm:$0xff]
        %v612 = vld [vmem:[%s426 + $0xb0] sm:$0xff]
        %v613 = vld [vmem:[%s426 + $0xb8] sm:$0xff]
        %v614 = vld [vmem:[%s426 + $0xc0] sm:$0xff]
        %v615 = vld [vmem:[%s426 + $0xc8] sm:$0xff]
        %v616 = vld [vmem:[%s426 + $0xd0] sm:$0xff]
        %v617 = vld [vmem:[%s426 + $0xd8] sm:$0xff]
        %v618 = vld [vmem:[%s426 + $0xe0] sm:$0xff]
        %v619 = vld [vmem:[%s426 + $0xe8] sm:$0xff]
        %v620 = vld [vmem:[%s426 + $0xf0] sm:$0xff]
        %v621 = vld [vmem:[%s426 + $0xf8] sm:$0xff]
        %v622 = vld [vmem:[%s426 + $0x100] sm:$0xff]
        %v623 = vld [vmem:[%s426 + $0x108] sm:$0xff]
        %v624 = vld [vmem:[%s426 + $0x110] sm:$0xff]
        %v625 = vld [vmem:[%s426 + $0x118] sm:$0xff]
        %v626 = vld [vmem:[%s426 + $0x120] sm:$0xff]
        %v627 = vld [vmem:[%s426 + $0x128] sm:$0xff]
        %v628 = vld [vmem:[%s426 + $0x130] sm:$0xff]
        %v629 = vld [vmem:[%s426 + $0x138] sm:$0xff]
        %v630 = vld [vmem:[%s426 + $0x140] sm:$0xff]
        %v631 = vld [vmem:[%s426 + $0x148] sm:$0xff]
        %v632 = vld [vmem:[%s426 + $0x150] sm:$0xff]
        %v633 = vld [vmem:[%s426 + $0x158] sm:$0xff]
        %v634 = vld [vmem:[%s426 + $0x160] sm:$0xff]
        %v635 = vld [vmem:[%s426 + $0x168] sm:$0xff]
        %v636 = vld [vmem:[%s426 + $0x170] sm:$0xff]
        %v637 = vld [vmem:[%s426 + $0x178] sm:$0xff]
        %v638 = vld [vmem:[%s426 + $0x180] sm:$0xff]
        %v639 = vld [vmem:[%s426 + $0x188] sm:$0xff]
        %v640 = vld [vmem:[%s426 + $0x190] sm:$0xff]
        %v641 = vld [vmem:[%s426 + $0x198] sm:$0xff]
        %v642 = vld [vmem:[%s426 + $0x1a0] sm:$0xff]
        %v643 = vld [vmem:[%s426 + $0x1a8] sm:$0xff]
        %v644 = vld [vmem:[%s426 + $0x1b0] sm:$0xff]
        %v645 = vld [vmem:[%s426 + $0x1b8] sm:$0xff]
        %v646 = vld [vmem:[%s426 + $0x1c0] sm:$0xff]
        %v647 = vld [vmem:[%s426 + $0x1c8] sm:$0xff]
        %v648 = vld [vmem:[%s426 + $0x1d0] sm:$0xff]
        %v649 = vld [vmem:[%s426 + $0x1d8] sm:$0xff]
        %v650 = vld [vmem:[%s426 + $0x1e0] sm:$0xff]
        %v651 = vld [vmem:[%s426 + $0x1e8] sm:$0xff]
        %v652 = vld [vmem:[%s426 + $0x1f0] sm:$0xff]
        %v653 = vld [vmem:[%s426 + $0x1f8] sm:$0xff]
        %v654 = vld [vmem:[%s426 + $0x200] sm:$0xff]
        %v655 = vld [vmem:[%s426 + $0x208] sm:$0xff]
        %v656 = vld [vmem:[%s426 + $0x210] sm:$0xff]
        %v657 = vld [vmem:[%s426 + $0x218] sm:$0xff]
        %v658 = vld [vmem:[%s426 + $0x220] sm:$0xff]
        %v659 = vld [vmem:[%s426 + $0x228] sm:$0xff]
        %v660 = vld [vmem:[%s426 + $0x230] sm:$0xff]
        %v661 = vld [vmem:[%s426 + $0x238] sm:$0xff]
        %v662 = vld [vmem:[%s426 + $0x240] sm:$0xff]
        %v663 = vld [vmem:[%s426 + $0x248] sm:$0xff]
        %v664 = vld [vmem:[%s426 + $0x250] sm:$0xff]
        %v665 = vld [vmem:[%s426 + $0x258] sm:$0xff]
        %v666 = vld [vmem:[%s426 + $0x260] sm:$0xff]
        %v667 = vld [vmem:[%s426 + $0x268] sm:$0xff]
        %v668 = vld [vmem:[%s426 + $0x270] sm:$0xff]
        %v669 = vld [vmem:[%s426 + $0x278] sm:$0xff]
        %v670 = vld [vmem:[%s426 + $0x280] sm:$0xff]
        %v671 = vld [vmem:[%s426 + $0x288] sm:$0xff]
        %v672 = vld [vmem:[%s426 + $0x290] sm:$0xff]
        %v673 = vld [vmem:[%s426 + $0x298] sm:$0xff]
        %v674 = vld [vmem:[%s426 + $0x2a0] sm:$0xff]
        %v675 = vld [vmem:[%s426 + $0x2a8] sm:$0xff]
        %v676 = vld [vmem:[%s426 + $0x2b0] sm:$0xff]
        %v677 = vld [vmem:[%s426 + $0x2b8] sm:$0xff]
        %v678 = vld [vmem:[%s426 + $0x2c0] sm:$0xff]
        %v679 = vld [vmem:[%s426 + $0x2c8] sm:$0xff]
        %v680 = vld [vmem:[%s426 + $0x2d0] sm:$0xff]
        %v681 = vld [vmem:[%s426 + $0x2d8] sm:$0xff]
        %v682 = vld [vmem:[%s426 + $0x2e0] sm:$0xff]
        %v683 = vld [vmem:[%s426 + $0x2e8] sm:$0xff]
        %v684 = vld [vmem:[%s426 + $0x2f0] sm:$0xff]
        %v685 = vld [vmem:[%s426 + $0x2f8] sm:$0xff]
        %v686 = vld [vmem:[%s426 + $0x300] sm:$0xff]
        %v687 = vld [vmem:[%s426 + $0x308] sm:$0xff]
        %v688 = vld [vmem:[%s426 + $0x310] sm:$0xff]
        %v689 = vld [vmem:[%s426 + $0x318] sm:$0xff]
        %v690 = vld [vmem:[%s426 + $0x320] sm:$0xff]
        %v691 = vld [vmem:[%s426 + $0x328] sm:$0xff]
        %v692 = vld [vmem:[%s426 + $0x330] sm:$0xff]
        %v693 = vld [vmem:[%s426 + $0x338] sm:$0xff]
        %v694 = vld [vmem:[%s426 + $0x340] sm:$0xff]
        %v695 = vld [vmem:[%s426 + $0x348] sm:$0xff]
        %v696 = vld [vmem:[%s426 + $0x350] sm:$0xff]
        %v697 = vld [vmem:[%s426 + $0x358] sm:$0xff]
        %v698 = vld [vmem:[%s426 + $0x360] sm:$0xff]
        %v699 = vld [vmem:[%s426 + $0x368] sm:$0xff]
        %v700 = vld [vmem:[%s426 + $0x370] sm:$0xff]
        %v701 = vld [vmem:[%s426 + $0x378] sm:$0xff]
        %v702 = vld [vmem:[%s426 + $0x380] sm:$0xff]
        %v703 = vld [vmem:[%s426 + $0x388] sm:$0xff]
        %v704 = vld [vmem:[%s426 + $0x390] sm:$0xff]
        %v705 = vld [vmem:[%s426 + $0x398] sm:$0xff]
        %v706 = vld [vmem:[%s426 + $0x3a0] sm:$0xff]
        %v707 = vld [vmem:[%s426 + $0x3a8] sm:$0xff]
        %v708 = vld [vmem:[%s426 + $0x3b0] sm:$0xff]
        %v709 = vld [vmem:[%s426 + $0x3b8] sm:$0xff]
        %v710 = vld [vmem:[%s426 + $0x3c0] sm:$0xff]
        %v711 = vld [vmem:[%s426 + $0x3c8] sm:$0xff]
        %v712 = vld [vmem:[%s426 + $0x3d0] sm:$0xff]
        %v713 = vld [vmem:[%s426 + $0x3d8] sm:$0xff]
        %v714 = vld [vmem:[%s426 + $0x3e0] sm:$0xff]
        %v715 = vld [vmem:[%s426 + $0x3e8] sm:$0xff]
        %v716 = vld [vmem:[%s426 + $0x3f0] sm:$0xff]
        %v717 = vld [vmem:[%s426 + $0x3f8] sm:$0xff]
        %v718 = vld [vmem:[%s426 + $0x400] sm:$0xff]
        %v719 = vld [vmem:[%s426 + $0x408] sm:$0xff]
        %v720 = vld [vmem:[%s426 + $0x410] sm:$0xff]
        %v721 = vld [vmem:[%s426 + $0x418] sm:$0xff]
        %v722 = vld [vmem:[%s426 + $0x420] sm:$0xff]
        %v723 = vld [vmem:[%s426 + $0x428] sm:$0xff]
        %v724 = vld [vmem:[%s426 + $0x430] sm:$0xff]
        %v725 = vld [vmem:[%s426 + $0x438] sm:$0xff]
        %v726 = vld [vmem:[%s426 + $0x440] sm:$0xff]
        %v727 = vld [vmem:[%s426 + $0x448] sm:$0xff]
        %v728 = vld [vmem:[%s426 + $0x450] sm:$0xff]
        %v729 = vld [vmem:[%s426 + $0x458] sm:$0xff]
        %v730 = vld [vmem:[%s426 + $0x460] sm:$0xff]
        %v731 = vld [vmem:[%s426 + $0x468] sm:$0xff]
        %v732 = vld [vmem:[%s426 + $0x470] sm:$0xff]
        %v733 = vld [vmem:[%s426 + $0x478] sm:$0xff]
        %v734 = vld [vmem:[%s426 + $0x480] sm:$0xff]
        %v735 = vld [vmem:[%s426 + $0x488] sm:$0xff]
        %v736 = vld [vmem:[%s426 + $0x490] sm:$0xff]
        %v737 = vld [vmem:[%s426 + $0x498] sm:$0xff]
        %v738 = vld [vmem:[%s426 + $0x4a0] sm:$0xff]
        %v739 = vld [vmem:[%s426 + $0x4a8] sm:$0xff]
        %v740 = vld [vmem:[%s426 + $0x4b0] sm:$0xff]
        %v741 = vld [vmem:[%s426 + $0x4b8] sm:$0xff]
        %v742 = vld [vmem:[%s426 + $0x4c0] sm:$0xff]
        %v743 = vld [vmem:[%s426 + $0x4c8] sm:$0xff]
        %v744 = vld [vmem:[%s426 + $0x4d0] sm:$0xff]
        %v745 = vld [vmem:[%s426 + $0x4d8] sm:$0xff]
        %v746 = vld [vmem:[%s426 + $0x4e0] sm:$0xff]
        %v747 = vld [vmem:[%s426 + $0x4e8] sm:$0xff]
        %v748 = vld [vmem:[%s426 + $0x4f0] sm:$0xff]
        %v749 = vld [vmem:[%s426 + $0x4f8] sm:$0xff]
        %v910 = vunpack.c.l.b16 %v590
        %v911 = vunpack.c.h.b16 %v590
        %v912 = vunpack.c.l.b16 %v591
        %v913 = vunpack.c.h.b16 %v591
        %v914 = vunpack.c.l.b16 %v592
        %v915 = vunpack.c.h.b16 %v592
        %v916 = vunpack.c.l.b16 %v593
        %v917 = vunpack.c.h.b16 %v593
        %v918 = vunpack.c.l.b16 %v594
        %v919 = vunpack.c.h.b16 %v594
        %v920 = vunpack.c.l.b16 %v595
        %v921 = vunpack.c.h.b16 %v595
        %v922 = vunpack.c.l.b16 %v596
        %v923 = vunpack.c.h.b16 %v596
        %v924 = vunpack.c.l.b16 %v597
        %v925 = vunpack.c.h.b16 %v597
        %v926 = vunpack.c.l.b16 %v598
        %v927 = vunpack.c.h.b16 %v598
        %v928 = vunpack.c.l.b16 %v599
        %v929 = vunpack.c.h.b16 %v599
        %v930 = vunpack.c.l.b16 %v600
        %v931 = vunpack.c.h.b16 %v600
        %v932 = vunpack.c.l.b16 %v601
        %v933 = vunpack.c.h.b16 %v601
        %v934 = vunpack.c.l.b16 %v602
        %v935 = vunpack.c.h.b16 %v602
        %v936 = vunpack.c.l.b16 %v603
        %v937 = vunpack.c.h.b16 %v603
        %v938 = vunpack.c.l.b16 %v604
        %v939 = vunpack.c.h.b16 %v604
        %v940 = vunpack.c.l.b16 %v605
        %v941 = vunpack.c.h.b16 %v605
        %v942 = vunpack.c.l.b16 %v606
        %v943 = vunpack.c.h.b16 %v606
        %v944 = vunpack.c.l.b16 %v607
        %v945 = vunpack.c.h.b16 %v607
        %v946 = vunpack.c.l.b16 %v608
        %v947 = vunpack.c.h.b16 %v608
        %v948 = vunpack.c.l.b16 %v609
        %v949 = vunpack.c.h.b16 %v609
        %v950 = vunpack.c.l.b16 %v610
        %v951 = vunpack.c.h.b16 %v610
        %v952 = vunpack.c.l.b16 %v611
        %v953 = vunpack.c.h.b16 %v611
        %v954 = vunpack.c.l.b16 %v612
        %v955 = vunpack.c.h.b16 %v612
        %v956 = vunpack.c.l.b16 %v613
        %v957 = vunpack.c.h.b16 %v613
        %v958 = vunpack.c.l.b16 %v614
        %v959 = vunpack.c.h.b16 %v614
        %v960 = vunpack.c.l.b16 %v615
        %v961 = vunpack.c.h.b16 %v615
        %v962 = vunpack.c.l.b16 %v616
        %v963 = vunpack.c.h.b16 %v616
        %v964 = vunpack.c.l.b16 %v617
        %v965 = vunpack.c.h.b16 %v617
        %v966 = vunpack.c.l.b16 %v618
        %v967 = vunpack.c.h.b16 %v618
        %v968 = vunpack.c.l.b16 %v619
        %v969 = vunpack.c.h.b16 %v619
        %v970 = vunpack.c.l.b16 %v620
        %v971 = vunpack.c.h.b16 %v620
        %v972 = vunpack.c.l.b16 %v621
        %v973 = vunpack.c.h.b16 %v621
        %v974 = vunpack.c.l.b16 %v622
        %v975 = vunpack.c.h.b16 %v622
        %v976 = vunpack.c.l.b16 %v623
        %v977 = vunpack.c.h.b16 %v623
        %v978 = vunpack.c.l.b16 %v624
        %v979 = vunpack.c.h.b16 %v624
        %v980 = vunpack.c.l.b16 %v625
        %v981 = vunpack.c.h.b16 %v625
        %v982 = vunpack.c.l.b16 %v626
        %v983 = vunpack.c.h.b16 %v626
        %v984 = vunpack.c.l.b16 %v627
        %v985 = vunpack.c.h.b16 %v627
        %v986 = vunpack.c.l.b16 %v628
        %v987 = vunpack.c.h.b16 %v628
        %v988 = vunpack.c.l.b16 %v629
        %v989 = vunpack.c.h.b16 %v629
        %v990 = vunpack.c.l.b16 %v630
        %v991 = vunpack.c.h.b16 %v630
        %v992 = vunpack.c.l.b16 %v631
        %v993 = vunpack.c.h.b16 %v631
        %v994 = vunpack.c.l.b16 %v632
        %v995 = vunpack.c.h.b16 %v632
        %v996 = vunpack.c.l.b16 %v633
        %v997 = vunpack.c.h.b16 %v633
        %v998 = vunpack.c.l.b16 %v634
        %v999 = vunpack.c.h.b16 %v634
        %v1000 = vunpack.c.l.b16 %v635
        %v1001 = vunpack.c.h.b16 %v635
        %v1002 = vunpack.c.l.b16 %v636
        %v1003 = vunpack.c.h.b16 %v636
        %v1004 = vunpack.c.l.b16 %v637
        %v1005 = vunpack.c.h.b16 %v637
        %v1006 = vunpack.c.l.b16 %v638
        %v1007 = vunpack.c.h.b16 %v638
        %v1008 = vunpack.c.l.b16 %v639
        %v1009 = vunpack.c.h.b16 %v639
        %v1010 = vunpack.c.l.b16 %v640
        %v1011 = vunpack.c.h.b16 %v640
        %v1012 = vunpack.c.l.b16 %v641
        %v1013 = vunpack.c.h.b16 %v641
        %v1014 = vunpack.c.l.b16 %v642
        %v1015 = vunpack.c.h.b16 %v642
        %v1016 = vunpack.c.l.b16 %v643
        %v1017 = vunpack.c.h.b16 %v643
        %v1018 = vunpack.c.l.b16 %v644
        %v1019 = vunpack.c.h.b16 %v644
        %v1020 = vunpack.c.l.b16 %v645
        %v1021 = vunpack.c.h.b16 %v645
        %v1022 = vunpack.c.l.b16 %v646
        %v1023 = vunpack.c.h.b16 %v646
        %v1024 = vunpack.c.l.b16 %v647
        %v1025 = vunpack.c.h.b16 %v647
        %v1026 = vunpack.c.l.b16 %v648
        %v1027 = vunpack.c.h.b16 %v648
        %v1028 = vunpack.c.l.b16 %v649
        %v1029 = vunpack.c.h.b16 %v649
        %v1030 = vunpack.c.l.b16 %v650
        %v1031 = vunpack.c.h.b16 %v650
        %v1032 = vunpack.c.l.b16 %v651
        %v1033 = vunpack.c.h.b16 %v651
        %v1034 = vunpack.c.l.b16 %v652
        %v1035 = vunpack.c.h.b16 %v652
        %v1036 = vunpack.c.l.b16 %v653
        %v1037 = vunpack.c.h.b16 %v653
        %v1038 = vunpack.c.l.b16 %v654
        %v1039 = vunpack.c.h.b16 %v654
        %v1040 = vunpack.c.l.b16 %v655
        %v1041 = vunpack.c.h.b16 %v655
        %v1042 = vunpack.c.l.b16 %v656
        %v1043 = vunpack.c.h.b16 %v656
        %v1044 = vunpack.c.l.b16 %v657
        %v1045 = vunpack.c.h.b16 %v657
        %v1046 = vunpack.c.l.b16 %v658
        %v1047 = vunpack.c.h.b16 %v658
        %v1048 = vunpack.c.l.b16 %v659
        %v1049 = vunpack.c.h.b16 %v659
        %v1050 = vunpack.c.l.b16 %v660
        %v1051 = vunpack.c.h.b16 %v660
        %v1052 = vunpack.c.l.b16 %v661
        %v1053 = vunpack.c.h.b16 %v661
        %v1054 = vunpack.c.l.b16 %v662
        %v1055 = vunpack.c.h.b16 %v662
        %v1056 = vunpack.c.l.b16 %v663
        %v1057 = vunpack.c.h.b16 %v663
        %v1058 = vunpack.c.l.b16 %v664
        %v1059 = vunpack.c.h.b16 %v664
        %v1060 = vunpack.c.l.b16 %v665
        %v1061 = vunpack.c.h.b16 %v665
        %v1062 = vunpack.c.l.b16 %v666
        %v1063 = vunpack.c.h.b16 %v666
        %v1064 = vunpack.c.l.b16 %v667
        %v1065 = vunpack.c.h.b16 %v667
        %v1066 = vunpack.c.l.b16 %v668
        %v1067 = vunpack.c.h.b16 %v668
        %v1068 = vunpack.c.l.b16 %v669
        %v1069 = vunpack.c.h.b16 %v669
        %v1070 = vunpack.c.l.b16 %v670
        %v1071 = vunpack.c.h.b16 %v670
        %v1072 = vunpack.c.l.b16 %v671
        %v1073 = vunpack.c.h.b16 %v671
        %v1074 = vunpack.c.l.b16 %v672
        %v1075 = vunpack.c.h.b16 %v672
        %v1076 = vunpack.c.l.b16 %v673
        %v1077 = vunpack.c.h.b16 %v673
        %v1078 = vunpack.c.l.b16 %v674
        %v1079 = vunpack.c.h.b16 %v674
        %v1080 = vunpack.c.l.b16 %v675
        %v1081 = vunpack.c.h.b16 %v675
        %v1082 = vunpack.c.l.b16 %v676
        %v1083 = vunpack.c.h.b16 %v676
        %v1084 = vunpack.c.l.b16 %v677
        %v1085 = vunpack.c.h.b16 %v677
        %v1086 = vunpack.c.l.b16 %v678
        %v1087 = vunpack.c.h.b16 %v678
        %v1088 = vunpack.c.l.b16 %v679
        %v1089 = vunpack.c.h.b16 %v679
        %v1090 = vunpack.c.l.b16 %v680
        %v1091 = vunpack.c.h.b16 %v680
        %v1092 = vunpack.c.l.b16 %v681
        %v1093 = vunpack.c.h.b16 %v681
        %v1094 = vunpack.c.l.b16 %v682
        %v1095 = vunpack.c.h.b16 %v682
        %v1096 = vunpack.c.l.b16 %v683
        %v1097 = vunpack.c.h.b16 %v683
        %v1098 = vunpack.c.l.b16 %v684
        %v1099 = vunpack.c.h.b16 %v684
        %v1100 = vunpack.c.l.b16 %v685
        %v1101 = vunpack.c.h.b16 %v685
        %v1102 = vunpack.c.l.b16 %v686
        %v1103 = vunpack.c.h.b16 %v686
        %v1104 = vunpack.c.l.b16 %v687
        %v1105 = vunpack.c.h.b16 %v687
        %v1106 = vunpack.c.l.b16 %v688
        %v1107 = vunpack.c.h.b16 %v688
        %v1108 = vunpack.c.l.b16 %v689
        %v1109 = vunpack.c.h.b16 %v689
        %v1110 = vunpack.c.l.b16 %v690
        %v1111 = vunpack.c.h.b16 %v690
        %v1112 = vunpack.c.l.b16 %v691
        %v1113 = vunpack.c.h.b16 %v691
        %v1114 = vunpack.c.l.b16 %v692
        %v1115 = vunpack.c.h.b16 %v692
        %v1116 = vunpack.c.l.b16 %v693
        %v1117 = vunpack.c.h.b16 %v693
        %v1118 = vunpack.c.l.b16 %v694
        %v1119 = vunpack.c.h.b16 %v694
        %v1120 = vunpack.c.l.b16 %v695
        %v1121 = vunpack.c.h.b16 %v695
        %v1122 = vunpack.c.l.b16 %v696
        %v1123 = vunpack.c.h.b16 %v696
        %v1124 = vunpack.c.l.b16 %v697
        %v1125 = vunpack.c.h.b16 %v697
        %v1126 = vunpack.c.l.b16 %v698
        %v1127 = vunpack.c.h.b16 %v698
        %v1128 = vunpack.c.l.b16 %v699
        %v1129 = vunpack.c.h.b16 %v699
        %v1130 = vunpack.c.l.b16 %v700
        %v1131 = vunpack.c.h.b16 %v700
        %v1132 = vunpack.c.l.b16 %v701
        %v1133 = vunpack.c.h.b16 %v701
        %v1134 = vunpack.c.l.b16 %v702
        %v1135 = vunpack.c.h.b16 %v702
        %v1136 = vunpack.c.l.b16 %v703
        %v1137 = vunpack.c.h.b16 %v703
        %v1138 = vunpack.c.l.b16 %v704
        %v1139 = vunpack.c.h.b16 %v704
        %v1140 = vunpack.c.l.b16 %v705
        %v1141 = vunpack.c.h.b16 %v705
        %v1142 = vunpack.c.l.b16 %v706
        %v1143 = vunpack.c.h.b16 %v706
        %v1144 = vunpack.c.l.b16 %v707
        %v1145 = vunpack.c.h.b16 %v707
        %v1146 = vunpack.c.l.b16 %v708
        %v1147 = vunpack.c.h.b16 %v708
        %v1148 = vunpack.c.l.b16 %v709
        %v1149 = vunpack.c.h.b16 %v709
        %v1150 = vunpack.c.l.b16 %v710
        %v1151 = vunpack.c.h.b16 %v710
        %v1152 = vunpack.c.l.b16 %v711
        %v1153 = vunpack.c.h.b16 %v711
        %v1154 = vunpack.c.l.b16 %v712
        %v1155 = vunpack.c.h.b16 %v712
        %v1156 = vunpack.c.l.b16 %v713
        %v1157 = vunpack.c.h.b16 %v713
        %v1158 = vunpack.c.l.b16 %v714
        %v1159 = vunpack.c.h.b16 %v714
        %v1160 = vunpack.c.l.b16 %v715
        %v1161 = vunpack.c.h.b16 %v715
        %v1162 = vunpack.c.l.b16 %v716
        %v1163 = vunpack.c.h.b16 %v716
        %v1164 = vunpack.c.l.b16 %v717
        %v1165 = vunpack.c.h.b16 %v717
        %v1166 = vunpack.c.l.b16 %v718
        %v1167 = vunpack.c.h.b16 %v718
        %v1168 = vunpack.c.l.b16 %v719
        %v1169 = vunpack.c.h.b16 %v719
        %v1170 = vunpack.c.l.b16 %v720
        %v1171 = vunpack.c.h.b16 %v720
        %v1172 = vunpack.c.l.b16 %v721
        %v1173 = vunpack.c.h.b16 %v721
        %v1174 = vunpack.c.l.b16 %v722
        %v1175 = vunpack.c.h.b16 %v722
        %v1176 = vunpack.c.l.b16 %v723
        %v1177 = vunpack.c.h.b16 %v723
        %v1178 = vunpack.c.l.b16 %v724
        %v1179 = vunpack.c.h.b16 %v724
        %v1180 = vunpack.c.l.b16 %v725
        %v1181 = vunpack.c.h.b16 %v725
        %v1182 = vunpack.c.l.b16 %v726
        %v1183 = vunpack.c.h.b16 %v726
        %v1184 = vunpack.c.l.b16 %v727
        %v1185 = vunpack.c.h.b16 %v727
        %v1186 = vunpack.c.l.b16 %v728
        %v1187 = vunpack.c.h.b16 %v728
        %v1188 = vunpack.c.l.b16 %v729
        %v1189 = vunpack.c.h.b16 %v729
        %v1190 = vunpack.c.l.b16 %v730
        %v1191 = vunpack.c.h.b16 %v730
        %v1192 = vunpack.c.l.b16 %v731
        %v1193 = vunpack.c.h.b16 %v731
        %v1194 = vunpack.c.l.b16 %v732
        %v1195 = vunpack.c.h.b16 %v732
        %v1196 = vunpack.c.l.b16 %v733
        %v1197 = vunpack.c.h.b16 %v733
        %v1198 = vunpack.c.l.b16 %v734
        %v1199 = vunpack.c.h.b16 %v734
        %v1200 = vunpack.c.l.b16 %v735
        %v1201 = vunpack.c.h.b16 %v735
        %v1202 = vunpack.c.l.b16 %v736
        %v1203 = vunpack.c.h.b16 %v736
        %v1204 = vunpack.c.l.b16 %v737
        %v1205 = vunpack.c.h.b16 %v737
        %v1206 = vunpack.c.l.b16 %v738
        %v1207 = vunpack.c.h.b16 %v738
        %v1208 = vunpack.c.l.b16 %v739
        %v1209 = vunpack.c.h.b16 %v739
        %v1210 = vunpack.c.l.b16 %v740
        %v1211 = vunpack.c.h.b16 %v740
        %v1212 = vunpack.c.l.b16 %v741
        %v1213 = vunpack.c.h.b16 %v741
        %v1214 = vunpack.c.l.b16 %v742
        %v1215 = vunpack.c.h.b16 %v742
        %v1216 = vunpack.c.l.b16 %v743
        %v1217 = vunpack.c.h.b16 %v743
        %v1218 = vunpack.c.l.b16 %v744
        %v1219 = vunpack.c.h.b16 %v744
        %v1220 = vunpack.c.l.b16 %v745
        %v1221 = vunpack.c.h.b16 %v745
        %v1222 = vunpack.c.l.b16 %v746
        %v1223 = vunpack.c.h.b16 %v746
        %v1224 = vunpack.c.l.b16 %v747
        %v1225 = vunpack.c.h.b16 %v747
        %v1226 = vunpack.c.l.b16 %v748
        %v1227 = vunpack.c.h.b16 %v748
        %v1228 = vunpack.c.l.b16 %v749
        %v1229 = vunpack.c.h.b16 %v749
        %v1230 = vpack.c.b16 %v920, %v910
        %v1231 = vpack.c.b16 %v921, %v911
        %v1232 = vpack.c.b16 %v922, %v912
        %v1233 = vpack.c.b16 %v923, %v913
        %v1234 = vpack.c.b16 %v924, %v914
        %v1235 = vpack.c.b16 %v925, %v915
        %v1236 = vpack.c.b16 %v926, %v916
        %v1237 = vpack.c.b16 %v927, %v917
        %v1238 = vpack.c.b16 %v928, %v918
        %v1239 = vpack.c.b16 %v929, %v919
        %v1240 = vpack.c.b16 %v940, %v930
        %v1241 = vpack.c.b16 %v941, %v931
        %v1242 = vpack.c.b16 %v942, %v932
        %v1243 = vpack.c.b16 %v943, %v933
        %v1244 = vpack.c.b16 %v944, %v934
        %v1245 = vpack.c.b16 %v945, %v935
        %v1246 = vpack.c.b16 %v946, %v936
        %v1247 = vpack.c.b16 %v947, %v937
        %v1248 = vpack.c.b16 %v948, %v938
        %v1249 = vpack.c.b16 %v949, %v939
        %v1250 = vpack.c.b16 %v960, %v950
        %v1251 = vpack.c.b16 %v961, %v951
        %v1252 = vpack.c.b16 %v962, %v952
        %v1253 = vpack.c.b16 %v963, %v953
        %v1254 = vpack.c.b16 %v964, %v954
        %v1255 = vpack.c.b16 %v965, %v955
        %v1256 = vpack.c.b16 %v966, %v956
        %v1257 = vpack.c.b16 %v967, %v957
        %v1258 = vpack.c.b16 %v968, %v958
        %v1259 = vpack.c.b16 %v969, %v959
        %v1260 = vpack.c.b16 %v980, %v970
        %v1261 = vpack.c.b16 %v981, %v971
        %v1262 = vpack.c.b16 %v982, %v972
        %v1263 = vpack.c.b16 %v983, %v973
        %v1264 = vpack.c.b16 %v984, %v974
        %v1265 = vpack.c.b16 %v985, %v975
        %v1266 = vpack.c.b16 %v986, %v976
        %v1267 = vpack.c.b16 %v987, %v977
        %v1268 = vpack.c.b16 %v988, %v978
        %v1269 = vpack.c.b16 %v989, %v979
        %v1270 = vpack.c.b16 %v1000, %v990
        %v1271 = vpack.c.b16 %v1001, %v991
        %v1272 = vpack.c.b16 %v1002, %v992
        %v1273 = vpack.c.b16 %v1003, %v993
        %v1274 = vpack.c.b16 %v1004, %v994
        %v1275 = vpack.c.b16 %v1005, %v995
        %v1276 = vpack.c.b16 %v1006, %v996
        %v1277 = vpack.c.b16 %v1007, %v997
        %v1278 = vpack.c.b16 %v1008, %v998
        %v1279 = vpack.c.b16 %v1009, %v999
        %v1280 = vpack.c.b16 %v1020, %v1010
        %v1281 = vpack.c.b16 %v1021, %v1011
        %v1282 = vpack.c.b16 %v1022, %v1012
        %v1283 = vpack.c.b16 %v1023, %v1013
        %v1284 = vpack.c.b16 %v1024, %v1014
        %v1285 = vpack.c.b16 %v1025, %v1015
        %v1286 = vpack.c.b16 %v1026, %v1016
        %v1287 = vpack.c.b16 %v1027, %v1017
        %v1288 = vpack.c.b16 %v1028, %v1018
        %v1289 = vpack.c.b16 %v1029, %v1019
        %v1290 = vpack.c.b16 %v1040, %v1030
        %v1291 = vpack.c.b16 %v1041, %v1031
        %v1292 = vpack.c.b16 %v1042, %v1032
        %v1293 = vpack.c.b16 %v1043, %v1033
        %v1294 = vpack.c.b16 %v1044, %v1034
        %v1295 = vpack.c.b16 %v1045, %v1035
        %v1296 = vpack.c.b16 %v1046, %v1036
        %v1297 = vpack.c.b16 %v1047, %v1037
        %v1298 = vpack.c.b16 %v1048, %v1038
        %v1299 = vpack.c.b16 %v1049, %v1039
        %v1300 = vpack.c.b16 %v1060, %v1050
        %v1301 = vpack.c.b16 %v1061, %v1051
        %v1302 = vpack.c.b16 %v1062, %v1052
        %v1303 = vpack.c.b16 %v1063, %v1053
        %v1304 = vpack.c.b16 %v1064, %v1054
        %v1305 = vpack.c.b16 %v1065, %v1055
        %v1306 = vpack.c.b16 %v1066, %v1056
        %v1307 = vpack.c.b16 %v1067, %v1057
        %v1308 = vpack.c.b16 %v1068, %v1058
        %v1309 = vpack.c.b16 %v1069, %v1059
        %v1310 = vpack.c.b16 %v1080, %v1070
        %v1311 = vpack.c.b16 %v1081, %v1071
        %v1312 = vpack.c.b16 %v1082, %v1072
        %v1313 = vpack.c.b16 %v1083, %v1073
        %v1314 = vpack.c.b16 %v1084, %v1074
        %v1315 = vpack.c.b16 %v1085, %v1075
        %v1316 = vpack.c.b16 %v1086, %v1076
        %v1317 = vpack.c.b16 %v1087, %v1077
        %v1318 = vpack.c.b16 %v1088, %v1078
        %v1319 = vpack.c.b16 %v1089, %v1079
        %v1320 = vpack.c.b16 %v1100, %v1090
        %v1321 = vpack.c.b16 %v1101, %v1091
        %v1322 = vpack.c.b16 %v1102, %v1092
        %v1323 = vpack.c.b16 %v1103, %v1093
        %v1324 = vpack.c.b16 %v1104, %v1094
        %v1325 = vpack.c.b16 %v1105, %v1095
        %v1326 = vpack.c.b16 %v1106, %v1096
        %v1327 = vpack.c.b16 %v1107, %v1097
        %v1328 = vpack.c.b16 %v1108, %v1098
        %v1329 = vpack.c.b16 %v1109, %v1099
        %v1330 = vpack.c.b16 %v1120, %v1110
        %v1331 = vpack.c.b16 %v1121, %v1111
        %v1332 = vpack.c.b16 %v1122, %v1112
        %v1333 = vpack.c.b16 %v1123, %v1113
        %v1334 = vpack.c.b16 %v1124, %v1114
        %v1335 = vpack.c.b16 %v1125, %v1115
        %v1336 = vpack.c.b16 %v1126, %v1116
        %v1337 = vpack.c.b16 %v1127, %v1117
        %v1338 = vpack.c.b16 %v1128, %v1118
        %v1339 = vpack.c.b16 %v1129, %v1119
        %v1340 = vpack.c.b16 %v1140, %v1130
        %v1341 = vpack.c.b16 %v1141, %v1131
        %v1342 = vpack.c.b16 %v1142, %v1132
        %v1343 = vpack.c.b16 %v1143, %v1133
        %v1344 = vpack.c.b16 %v1144, %v1134
        %v1345 = vpack.c.b16 %v1145, %v1135
        %v1346 = vpack.c.b16 %v1146, %v1136
        %v1347 = vpack.c.b16 %v1147, %v1137
        %v1348 = vpack.c.b16 %v1148, %v1138
        %v1349 = vpack.c.b16 %v1149, %v1139
        %v1350 = vpack.c.b16 %v1160, %v1150
        %v1351 = vpack.c.b16 %v1161, %v1151
        %v1352 = vpack.c.b16 %v1162, %v1152
        %v1353 = vpack.c.b16 %v1163, %v1153
        %v1354 = vpack.c.b16 %v1164, %v1154
        %v1355 = vpack.c.b16 %v1165, %v1155
        %v1356 = vpack.c.b16 %v1166, %v1156
        %v1357 = vpack.c.b16 %v1167, %v1157
        %v1358 = vpack.c.b16 %v1168, %v1158
        %v1359 = vpack.c.b16 %v1169, %v1159
        %v1360 = vpack.c.b16 %v1180, %v1170
        %v1361 = vpack.c.b16 %v1181, %v1171
        %v1362 = vpack.c.b16 %v1182, %v1172
        %v1363 = vpack.c.b16 %v1183, %v1173
        %v1364 = vpack.c.b16 %v1184, %v1174
        %v1365 = vpack.c.b16 %v1185, %v1175
        %v1366 = vpack.c.b16 %v1186, %v1176
        %v1367 = vpack.c.b16 %v1187, %v1177
        %v1368 = vpack.c.b16 %v1188, %v1178
        %v1369 = vpack.c.b16 %v1189, %v1179
        %v1370 = vpack.c.b16 %v1200, %v1190
        %v1371 = vpack.c.b16 %v1201, %v1191
        %v1372 = vpack.c.b16 %v1202, %v1192
        %v1373 = vpack.c.b16 %v1203, %v1193
        %v1374 = vpack.c.b16 %v1204, %v1194
        %v1375 = vpack.c.b16 %v1205, %v1195
        %v1376 = vpack.c.b16 %v1206, %v1196
        %v1377 = vpack.c.b16 %v1207, %v1197
        %v1378 = vpack.c.b16 %v1208, %v1198
        %v1379 = vpack.c.b16 %v1209, %v1199
        %v1380 = vpack.c.b16 %v1220, %v1210
        %v1381 = vpack.c.b16 %v1221, %v1211
        %v1382 = vpack.c.b16 %v1222, %v1212
        %v1383 = vpack.c.b16 %v1223, %v1213
        %v1384 = vpack.c.b16 %v1224, %v1214
        %v1385 = vpack.c.b16 %v1225, %v1215
        %v1386 = vpack.c.b16 %v1226, %v1216
        %v1387 = vpack.c.b16 %v1227, %v1217
        %v1388 = vpack.c.b16 %v1228, %v1218
        %v1389 = vpack.c.b16 %v1229, %v1219
        %1550 = vmatprep.subr.bf16.mxu0 %v1301
        %1551 = vmatpush1.bf16.msra.mxu0 %v1300
        %1552 = vmatprep.subr.bf16.mxu0 %v1291
        %1553 = vmatpush1.bf16.msra.mxu0 %v1290
        %1554 = vmatprep.subr.bf16.mxu0 %v1281
        %1555 = vmatpush1.bf16.msra.mxu0 %v1280
        %1556 = vmatprep.subr.bf16.mxu0 %v1271
        %1557 = vmatpush1.bf16.msra.mxu0 %v1270
        %1558 = vmatprep.subr.bf16.mxu0 %v1261
        %1559 = vmatpush1.bf16.msra.mxu0 %v1260
        %1560 = vmatprep.subr.bf16.mxu0 %v1251
        %1561 = vmatpush1.bf16.msra.mxu0 %v1250
        %1562 = vmatprep.subr.bf16.mxu0 %v1241
        %1563 = vmatpush1.bf16.msra.mxu0 %v1240
        %1564 = vmatprep.subr.bf16.mxu0 %v1231
        %1565 = vmatpush1.bf16.msra.mxu0 %v1230
        %1566 = vmatprep.subr.bf16.mxu0 %v1381
        %1567 = vmatpush2.bf16.msra.mxu0 %v1380
        %1568 = vmatprep.subr.bf16.mxu0 %v1371
        %1569 = vmatpush2.bf16.msra.mxu0 %v1370
        %1570 = vmatprep.subr.bf16.mxu0 %v1361
        %1571 = vmatpush2.bf16.msra.mxu0 %v1360
        %1572 = vmatprep.subr.bf16.mxu0 %v1351
        %1573 = vmatpush2.bf16.msra.mxu0 %v1350
        %1574 = vmatprep.subr.bf16.mxu0 %v1341
        %1575 = vmatpush2.bf16.msra.mxu0 %v1340
        %1576 = vmatprep.subr.bf16.mxu0 %v1331
        %1577 = vmatpush2.bf16.msra.mxu0 %v1330
        %1578 = vmatprep.subr.bf16.mxu0 %v1321
        %1579 = vmatpush2.bf16.msra.mxu0 %v1320
        %1580 = vmatprep.subr.bf16.mxu0 %v1311
        %1581 = vmatpush2.bf16.msra.mxu0 %v1310
        %1582 = vmatprep.mubr.bf16.mxu0 %v589
        %1583 = vmatmul.mubr.bf16.gmra.mxu0 %v588
        %v1584 = vpop.f32.mrf.mxu0
        %v1585 = vadd.f32 0.0, %v1584
        %v1586 = vpop.f32.mrf.mxu0
        %v1587 = vadd.f32 0.0, %v1586
        %v1588 = vpop.f32.mrf.mxu0
        %v1589 = vpop.f32.mrf.mxu0
        %1590 = vdwg.mxu0
        %1591 = vmatprep.subr.bf16.mxu0 %v1303
        %1592 = vmatpush1.bf16.msra.mxu0 %v1302
        %1593 = vmatprep.subr.bf16.mxu0 %v1293
        %1594 = vmatpush1.bf16.msra.mxu0 %v1292
        %1595 = vmatprep.subr.bf16.mxu0 %v1283
        %1596 = vmatpush1.bf16.msra.mxu0 %v1282
        %1597 = vmatprep.subr.bf16.mxu0 %v1273
        %1598 = vmatpush1.bf16.msra.mxu0 %v1272
        %1599 = vmatprep.subr.bf16.mxu0 %v1263
        %1600 = vmatpush1.bf16.msra.mxu0 %v1262
        %1601 = vmatprep.subr.bf16.mxu0 %v1253
        %1602 = vmatpush1.bf16.msra.mxu0 %v1252
        %1603 = vmatprep.subr.bf16.mxu0 %v1243
        %1604 = vmatpush1.bf16.msra.mxu0 %v1242
        %1605 = vmatprep.subr.bf16.mxu0 %v1233
        %1606 = vmatpush1.bf16.msra.mxu0 %v1232
        %1607 = vmatprep.subr.bf16.mxu0 %v1383
        %1608 = vmatpush2.bf16.msra.mxu0 %v1382
        %1609 = vmatprep.subr.bf16.mxu0 %v1373
        %1610 = vmatpush2.bf16.msra.mxu0 %v1372
        %1611 = vmatprep.subr.bf16.mxu0 %v1363
        %1612 = vmatpush2.bf16.msra.mxu0 %v1362
        %1613 = vmatprep.subr.bf16.mxu0 %v1353
        %1614 = vmatpush2.bf16.msra.mxu0 %v1352
        %1615 = vmatprep.subr.bf16.mxu0 %v1343
        %1616 = vmatpush2.bf16.msra.mxu0 %v1342
        %1617 = vmatprep.subr.bf16.mxu0 %v1333
        %1618 = vmatpush2.bf16.msra.mxu0 %v1332
        %1619 = vmatprep.subr.bf16.mxu0 %v1323
        %1620 = vmatpush2.bf16.msra.mxu0 %v1322
        %1621 = vmatprep.subr.bf16.mxu0 %v1313
        %1622 = vmatpush2.bf16.msra.mxu0 %v1312
        %1623 = vmatprep.mubr.bf16.mxu0 %v589
        %1624 = vmatmul.mubr.bf16.gmra.mxu0 %v588
        %v1625 = vpop.f32.mrf.mxu0
        %v1626 = vadd.f32 0.0, %v1625
        %v1627 = vpop.f32.mrf.mxu0
        %v1628 = vadd.f32 0.0, %v1627
        %v1629 = vpop.f32.mrf.mxu0
        %v1630 = vpop.f32.mrf.mxu0
        %1631 = vdwg.mxu0
        %1632 = vmatprep.subr.bf16.mxu0 %v1305
        %1633 = vmatpush1.bf16.msra.mxu0 %v1304
        %1634 = vmatprep.subr.bf16.mxu0 %v1295
        %1635 = vmatpush1.bf16.msra.mxu0 %v1294
        %1636 = vmatprep.subr.bf16.mxu0 %v1285
        %1637 = vmatpush1.bf16.msra.mxu0 %v1284
        %1638 = vmatprep.subr.bf16.mxu0 %v1275
        %1639 = vmatpush1.bf16.msra.mxu0 %v1274
        %1640 = vmatprep.subr.bf16.mxu0 %v1265
        %1641 = vmatpush1.bf16.msra.mxu0 %v1264
        %1642 = vmatprep.subr.bf16.mxu0 %v1255
        %1643 = vmatpush1.bf16.msra.mxu0 %v1254
        %1644 = vmatprep.subr.bf16.mxu0 %v1245
        %1645 = vmatpush1.bf16.msra.mxu0 %v1244
        %1646 = vmatprep.subr.bf16.mxu0 %v1235
        %1647 = vmatpush1.bf16.msra.mxu0 %v1234
        %1648 = vmatprep.subr.bf16.mxu0 %v1385
        %1649 = vmatpush2.bf16.msra.mxu0 %v1384
        %1650 = vmatprep.subr.bf16.mxu0 %v1375
        %1651 = vmatpush2.bf16.msra.mxu0 %v1374
        %1652 = vmatprep.subr.bf16.mxu0 %v1365
        %1653 = vmatpush2.bf16.msra.mxu0 %v1364
        %1654 = vmatprep.subr.bf16.mxu0 %v1355
        %1655 = vmatpush2.bf16.msra.mxu0 %v1354
        %1656 = vmatprep.subr.bf16.mxu0 %v1345
        %1657 = vmatpush2.bf16.msra.mxu0 %v1344
        %1658 = vmatprep.subr.bf16.mxu0 %v1335
        %1659 = vmatpush2.bf16.msra.mxu0 %v1334
        %1660 = vmatprep.subr.bf16.mxu0 %v1325
        %1661 = vmatpush2.bf16.msra.mxu0 %v1324
        %1662 = vmatprep.subr.bf16.mxu0 %v1315
        %1663 = vmatpush2.bf16.msra.mxu0 %v1314
        %1664 = vmatprep.mubr.bf16.mxu0 %v589
        %1665 = vmatmul.mubr.bf16.gmra.mxu0 %v588
        %v1666 = vpop.f32.mrf.mxu0
        %v1667 = vadd.f32 0.0, %v1666
        %v1668 = vpop.f32.mrf.mxu0
        %v1669 = vadd.f32 0.0, %v1668
        %v1670 = vpop.f32.mrf.mxu0
        %v1671 = vpop.f32.mrf.mxu0
        %1672 = vdwg.mxu0
        %1673 = vmatprep.subr.bf16.mxu0 %v1307
        %1674 = vmatpush1.bf16.msra.mxu0 %v1306
        %1675 = vmatprep.subr.bf16.mxu0 %v1297
        %1676 = vmatpush1.bf16.msra.mxu0 %v1296
        %1677 = vmatprep.subr.bf16.mxu0 %v1287
        %1678 = vmatpush1.bf16.msra.mxu0 %v1286
        %1679 = vmatprep.subr.bf16.mxu0 %v1277
        %1680 = vmatpush1.bf16.msra.mxu0 %v1276
        %1681 = vmatprep.subr.bf16.mxu0 %v1267
        %1682 = vmatpush1.bf16.msra.mxu0 %v1266
        %1683 = vmatprep.subr.bf16.mxu0 %v1257
        %1684 = vmatpush1.bf16.msra.mxu0 %v1256
        %1685 = vmatprep.subr.bf16.mxu0 %v1247
        %1686 = vmatpush1.bf16.msra.mxu0 %v1246
        %1687 = vmatprep.subr.bf16.mxu0 %v1237
        %1688 = vmatpush1.bf16.msra.mxu0 %v1236
        %1689 = vmatprep.subr.bf16.mxu0 %v1387
        %1690 = vmatpush2.bf16.msra.mxu0 %v1386
        %1691 = vmatprep.subr.bf16.mxu0 %v1377
        %1692 = vmatpush2.bf16.msra.mxu0 %v1376
        %1693 = vmatprep.subr.bf16.mxu0 %v1367
        %1694 = vmatpush2.bf16.msra.mxu0 %v1366
        %1695 = vmatprep.subr.bf16.mxu0 %v1357
        %1696 = vmatpush2.bf16.msra.mxu0 %v1356
        %1697 = vmatprep.subr.bf16.mxu0 %v1347
        %1698 = vmatpush2.bf16.msra.mxu0 %v1346
        %1699 = vmatprep.subr.bf16.mxu0 %v1337
        %1700 = vmatpush2.bf16.msra.mxu0 %v1336
        %1701 = vmatprep.subr.bf16.mxu0 %v1327
        %1702 = vmatpush2.bf16.msra.mxu0 %v1326
        %1703 = vmatprep.subr.bf16.mxu0 %v1317
        %1704 = vmatpush2.bf16.msra.mxu0 %v1316
        %1705 = vmatprep.mubr.bf16.mxu0 %v589
        %1706 = vmatmul.mubr.bf16.gmra.mxu0 %v588
        %v1707 = vpop.f32.mrf.mxu0
        %v1708 = vadd.f32 0.0, %v1707
        %v1709 = vpop.f32.mrf.mxu0
        %v1710 = vadd.f32 0.0, %v1709
        %v1711 = vpop.f32.mrf.mxu0
        %v1712 = vpop.f32.mrf.mxu0
        %1713 = vdwg.mxu0
        %1714 = vmatprep.subr.bf16.mxu0 %v1309
        %1715 = vmatpush1.bf16.msra.mxu0 %v1308
        %1716 = vmatprep.subr.bf16.mxu0 %v1299
        %1717 = vmatpush1.bf16.msra.mxu0 %v1298
        %1718 = vmatprep.subr.bf16.mxu0 %v1289
        %1719 = vmatpush1.bf16.msra.mxu0 %v1288
        %1720 = vmatprep.subr.bf16.mxu0 %v1279
        %1721 = vmatpush1.bf16.msra.mxu0 %v1278
        %1722 = vmatprep.subr.bf16.mxu0 %v1269
        %1723 = vmatpush1.bf16.msra.mxu0 %v1268
        %1724 = vmatprep.subr.bf16.mxu0 %v1259
        %1725 = vmatpush1.bf16.msra.mxu0 %v1258
        %1726 = vmatprep.subr.bf16.mxu0 %v1249
        %1727 = vmatpush1.bf16.msra.mxu0 %v1248
        %1728 = vmatprep.subr.bf16.mxu0 %v1239
        %1729 = vmatpush1.bf16.msra.mxu0 %v1238
        %1730 = vmatprep.subr.bf16.mxu0 %v1389
        %1731 = vmatpush2.bf16.msra.mxu0 %v1388
        %1732 = vmatprep.subr.bf16.mxu0 %v1379
        %1733 = vmatpush2.bf16.msra.mxu0 %v1378
        %1734 = vmatprep.subr.bf16.mxu0 %v1369
        %1735 = vmatpush2.bf16.msra.mxu0 %v1368
        %1736 = vmatprep.subr.bf16.mxu0 %v1359
        %1737 = vmatpush2.bf16.msra.mxu0 %v1358
        %1738 = vmatprep.subr.bf16.mxu0 %v1349
        %1739 = vmatpush2.bf16.msra.mxu0 %v1348
        %1740 = vmatprep.subr.bf16.mxu0 %v1339
        %1741 = vmatpush2.bf16.msra.mxu0 %v1338
        %1742 = vmatprep.subr.bf16.mxu0 %v1329
        %1743 = vmatpush2.bf16.msra.mxu0 %v1328
        %1744 = vmatprep.subr.bf16.mxu0 %v1319
        %1745 = vmatpush2.bf16.msra.mxu0 %v1318
        %1746 = vmatprep.mubr.bf16.mxu0 %v589
        %1747 = vmatmul.mubr.bf16.gmra.mxu0 %v588
        %v1748 = vpop.f32.mrf.mxu0
        %v1749 = vadd.f32 0.0, %v1748
        %v1750 = vpop.f32.mrf.mxu0
        %v1751 = vadd.f32 0.0, %v1750
        %v1752 = vpop.f32.mrf.mxu0
        %v1753 = vpop.f32.mrf.mxu0
        %1754 = vdwg.mxu0
        %v1765 = vcombine.low %v1585, %v1587
        %v1766 = vcombine.low %v1626, %v1628
        %v1768 = vunpack.c.l.s4 1983009808
        %v1769 = vunpack.c.0.s8 %v1768
        %v1770 = vlaneseq
        %v1771 = vshrl.u32 %v1770, 7
        %v1772 = vsub.s32 %v1769, %v1771
        %v1773 = vrot.slane %v1765, %v1772
        %v1775 = vunpack.c.l.s4 1983009808
        %v1776 = vunpack.c.0.s8 %v1775
        %v1777 = vlaneseq
        %v1778 = vshrl.u32 %v1777, 7
        %v1779 = vsub.s32 %v1776, %v1778
        %v1780 = vrot.slane %v1766, %v1779
        %v1781 = vcombine.low %v1773, %v1780
        %v1782 = vcombine.low %v1667, %v1669
        %v1783 = vcombine.low %v1708, %v1710
        %v1785 = vunpack.c.l.s4 1983009808
        %v1786 = vunpack.c.0.s8 %v1785
        %v1787 = vlaneseq
        %v1788 = vshrl.u32 %v1787, 7
        %v1789 = vsub.s32 %v1786, %v1788
        %v1790 = vrot.slane %v1782, %v1789
        %v1792 = vunpack.c.l.s4 1983009808
        %v1793 = vunpack.c.0.s8 %v1792
        %v1794 = vlaneseq
        %v1795 = vshrl.u32 %v1794, 7
        %v1796 = vsub.s32 %v1793, %v1795
        %v1797 = vrot.slane %v1783, %v1796
        %v1798 = vcombine.low %v1790, %v1797
        %v1799 = vcombine.low %v1749, %v1751
        %v1801 = vunpack.c.l.s4 1983009808
        %v1802 = vunpack.c.0.s8 %v1801
        %v1803 = vlaneseq
        %v1804 = vshrl.u32 %v1803, 7
        %v1805 = vsub.s32 %v1802, %v1804
        %v1806 = vrot.slane %v1799, %v1805
        %v1810 = vadd.f32 %v585, %v1781
        %v1811 = vadd.f32 %v586, %v1798
        %v1812 = vadd.f32 %v587, %v1806
        %1813 = vst [vmem:[#allocation2] sm:$0xff] %v1810
        %1814 = vst [vmem:[#allocation2 + $0x8] sm:$0xff] %v1811
        %vm1815 = vcmask 388098
        %vm1816 = vmor %vm1815, %vm535
        %1817 = vst.msk [vmem:[#allocation2 + $0x10] sm:$0xf] %vm1816, %v1812
        %p1818 = scmp.eq.s32.totalorder %s24, 4
        // Predicated region
        $region91: #{tpu_custom_call.1} parent=81 // pred_check
          %p1819 = pneg %p1818
        $region92: #{tpu_custom_call.1} parent=81 // pred_check_branch
          %1821 = sbr.rel (%p1819) target = $region94
        $region93: #{tpu_custom_call.1} parent=81 // pred_region
          %v1822 = vld [vmem:[#allocation2] sm:$0xff]
          %v1823 = vld [vmem:[#allocation2 + $0x8] sm:$0xff]
          %v1824 = vld [vmem:[#allocation2 + $0x10] sm:$0xf]
          %v1825 = vld [vmem:[%s4] sm:$0xff]
          %v1826 = vld [vmem:[%s4 + $0x8] sm:$0x3]
          %v1829 = vlaneseq
          %v1830 = vshrl.u32 %v1829, 7
          %v1831 = vsub.s32 0, %v1830
          %v1832 = vrot.slane %v1825, %v1831
          %v1833 = vlaneseq
          %v1834 = vshrl.u32 %v1833, 7
          %v1835 = vsub.s32 1, %v1834
          %v1836 = vrot.slane %v1825, %v1835
          %v1837 = vlaneseq
          %v1838 = vshrl.u32 %v1837, 7
          %v1839 = vsub.s32 2, %v1838
          %v1840 = vrot.slane %v1825, %v1839
          %v1841 = vlaneseq
          %v1842 = vshrl.u32 %v1841, 7
          %v1843 = vsub.s32 3, %v1842
          %v1844 = vrot.slane %v1825, %v1843
          %v1845 = vlaneseq
          %v1846 = vshrl.u32 %v1845, 7
          %v1847 = vsub.s32 4, %v1846
          %v1848 = vrot.slane %v1825, %v1847
          %v1849 = vlaneseq
          %v1850 = vshrl.u32 %v1849, 7
          %v1851 = vsub.s32 5, %v1850
          %v1852 = vrot.slane %v1825, %v1851
          %v1853 = vlaneseq
          %v1854 = vshrl.u32 %v1853, 7
          %v1855 = vsub.s32 6, %v1854
          %v1856 = vrot.slane %v1825, %v1855
          %v1857 = vlaneseq
          %v1858 = vshrl.u32 %v1857, 7
          %v1859 = vsub.s32 7, %v1858
          %v1860 = vrot.slane %v1825, %v1859
          %v1861 = vlaneseq
          %v1862 = vshrl.u32 %v1861, 7
          %v1863 = vsub.s32 0, %v1862
          %v1864 = vrot.slane %v1826, %v1863
          %v1865 = vlaneseq
          %v1866 = vshrl.u32 %v1865, 7
          %v1867 = vsub.s32 1, %v1866
          %v1868 = vrot.slane %v1826, %v1867
          %v1869 = vcombine.low %v1832, %v1836
          %v1870 = vcombine.low %v1840, %v1844
          %v1872 = vunpack.c.l.s4 1983009808
          %v1873 = vunpack.c.0.s8 %v1872
          %v1874 = vlaneseq
          %v1875 = vshrl.u32 %v1874, 7
          %v1876 = vsub.s32 %v1873, %v1875
          %v1877 = vrot.slane %v1869, %v1876
          %v1879 = vunpack.c.l.s4 1983009808
          %v1880 = vunpack.c.0.s8 %v1879
          %v1881 = vlaneseq
          %v1882 = vshrl.u32 %v1881, 7
          %v1883 = vsub.s32 %v1880, %v1882
          %v1884 = vrot.slane %v1870, %v1883
          %v1885 = vcombine.low %v1877, %v1884
          %v1886 = vcombine.low %v1848, %v1852
          %v1887 = vcombine.low %v1856, %v1860
          %v1889 = vunpack.c.l.s4 1983009808
          %v1890 = vunpack.c.0.s8 %v1889
          %v1891 = vlaneseq
          %v1892 = vshrl.u32 %v1891, 7
          %v1893 = vsub.s32 %v1890, %v1892
          %v1894 = vrot.slane %v1886, %v1893
          %v1896 = vunpack.c.l.s4 1983009808
          %v1897 = vunpack.c.0.s8 %v1896
          %v1898 = vlaneseq
          %v1899 = vshrl.u32 %v1898, 7
          %v1900 = vsub.s32 %v1897, %v1899
          %v1901 = vrot.slane %v1887, %v1900
          %v1902 = vcombine.low %v1894, %v1901
          %v1903 = vcombine.low %v1864, %v1868
          %v1905 = vunpack.c.l.s4 1983009808
          %v1906 = vunpack.c.0.s8 %v1905
          %v1907 = vlaneseq
          %v1908 = vshrl.u32 %v1907, 7
          %v1909 = vsub.s32 %v1906, %v1908
          %v1910 = vrot.slane %v1903, %v1909
          %v1914 = vadd.f32 %v1822, %v1885
          %v1915 = vadd.f32 %v1823, %v1902
          %v1916 = vadd.f32 %v1824, %v1910
          %v1917 = vxor.u32 %v1914, 2147483648
          %v1918 = vxor.u32 %v1915, 2147483648
          %v1919 = vxor.u32 %v1916, 2147483648
          %v1920 = vmul.f32 %v1917, 1.442695
          %v1921 = vpow.pop %v1920
          %v1922 = vmul.f32 %v1918, 1.442695
          %v1923 = vpow.pop %v1922
          %v1924 = vmul.f32 %v1919, 1.442695
          %v1925 = vpow.pop %v1924
          %v1926 = vadd.f32 %v1921, 1.0
          %v1927 = vadd.f32 %v1923, 1.0
          %v1928 = vadd.f32 %v1925, 1.0
          %v1929 = vrcp.pop %v1926
          %v1930 = vmul.f32 1.0, %v1929
          %v1931 = vrcp.pop %v1927
          %v1932 = vmul.f32 1.0, %v1931
          %v1933 = vrcp.pop %v1928
          %v1934 = vmul.f32 1.0, %v1933
          %v1938 = vcombine.high %v1930, %v1930
          %v1940 = vunpack.c.l.s4 1983009808
          %v1941 = vunpack.c.0.s8 %v1940
          %v1942 = vlaneseq
          %v1943 = vshrl.u32 %v1942, 7
          %v1944 = vsub.s32 %v1941, %v1943
          %v1945 = vrot.slane %v1930, %v1944
          %v1947 = vunpack.c.l.s4 1983009808
          %v1948 = vunpack.c.0.s8 %v1947
          %v1949 = vlaneseq
          %v1950 = vshrl.u32 %v1949, 7
          %v1951 = vsub.s32 %v1948, %v1950
          %v1952 = vrot.slane %v1938, %v1951
          %v1953 = vcombine.high %v1945, %v1945
          %v1954 = vcombine.high %v1952, %v1952
          %v1955 = vcombine.high %v1932, %v1932
          %v1957 = vunpack.c.l.s4 1983009808
          %v1958 = vunpack.c.0.s8 %v1957
          %v1959 = vlaneseq
          %v1960 = vshrl.u32 %v1959, 7
          %v1961 = vsub.s32 %v1958, %v1960
          %v1962 = vrot.slane %v1932, %v1961
          %v1964 = vunpack.c.l.s4 1983009808
          %v1965 = vunpack.c.0.s8 %v1964
          %v1966 = vlaneseq
          %v1967 = vshrl.u32 %v1966, 7
          %v1968 = vsub.s32 %v1965, %v1967
          %v1969 = vrot.slane %v1955, %v1968
          %v1970 = vcombine.high %v1962, %v1962
          %v1971 = vcombine.high %v1969, %v1969
          %v1973 = vunpack.c.l.s4 1983009808
          %v1974 = vunpack.c.0.s8 %v1973
          %v1975 = vlaneseq
          %v1976 = vshrl.u32 %v1975, 7
          %v1977 = vsub.s32 %v1974, %v1976
          %v1978 = vrot.slane %v1934, %v1977
          %v1979 = vcombine.high %v1978, %v1978
          %v1990 = vpack.c.bf16 %v1945, %v1945
          %v1991 = vpack.c.bf16 %v1953, %v1953
          %v1992 = vpack.c.bf16 %v1952, %v1952
          %v1993 = vpack.c.bf16 %v1954, %v1954
          %v1994 = vpack.c.bf16 %v1962, %v1962
          %v1995 = vpack.c.bf16 %v1970, %v1970
          %v1996 = vpack.c.bf16 %v1969, %v1969
          %v1997 = vpack.c.bf16 %v1971, %v1971
          %v1998 = vpack.c.bf16 %v1978, %v1978
          %v1999 = vpack.c.bf16 %v1979, %v1979
          %v2000 = vld [vmem:[%s5] sm:$0xff]
          %v2001 = vld [vmem:[%s5 + $0x8] sm:$0xff]
          %v2002 = vld [vmem:[%s5 + $0x10] sm:$0xff]
          %v2003 = vld [vmem:[%s5 + $0x18] sm:$0xff]
          %v2004 = vld [vmem:[%s5 + $0x20] sm:$0xff]
          %v2005 = vld [vmem:[%s5 + $0x28] sm:$0xff]
          %v2006 = vld [vmem:[%s5 + $0x30] sm:$0xff]
          %v2007 = vld [vmem:[%s5 + $0x38] sm:$0xff]
          %v2008 = vld [vmem:[%s5 + $0x40] sm:$0xff]
          %v2009 = vld [vmem:[%s5 + $0x48] sm:$0xff]
          %v2010 = vld [vmem:[%s5 + $0x50] sm:$0xff]
          %v2011 = vld [vmem:[%s5 + $0x58] sm:$0xff]
          %v2012 = vld [vmem:[%s5 + $0x60] sm:$0xff]
          %v2013 = vld [vmem:[%s5 + $0x68] sm:$0xff]
          %v2014 = vld [vmem:[%s5 + $0x70] sm:$0xff]
          %v2015 = vld [vmem:[%s5 + $0x78] sm:$0xff]
          %v2016 = vld [vmem:[%s5 + $0x80] sm:$0xff]
          %v2017 = vld [vmem:[%s5 + $0x88] sm:$0xff]
          %v2018 = vld [vmem:[%s5 + $0x90] sm:$0xff]
          %v2019 = vld [vmem:[%s5 + $0x98] sm:$0xff]
          %v2020 = vld [vmem:[%s5 + $0xa0] sm:$0xff]
          %v2021 = vld [vmem:[%s5 + $0xa8] sm:$0xff]
          %v2022 = vld [vmem:[%s5 + $0xb0] sm:$0xff]
          %v2023 = vld [vmem:[%s5 + $0xb8] sm:$0xff]
          %v2024 = vld [vmem:[%s5 + $0xc0] sm:$0xff]
          %v2025 = vld [vmem:[%s5 + $0xc8] sm:$0xff]
          %v2026 = vld [vmem:[%s5 + $0xd0] sm:$0xff]
          %v2027 = vld [vmem:[%s5 + $0xd8] sm:$0xff]
          %v2028 = vld [vmem:[%s5 + $0xe0] sm:$0xff]
          %v2029 = vld [vmem:[%s5 + $0xe8] sm:$0xff]
          %v2030 = vld [vmem:[%s5 + $0xf0] sm:$0xff]
          %v2031 = vld [vmem:[%s5 + $0xf8] sm:$0xff]
          %v2032 = vld [vmem:[%s5 + $0x100] sm:$0xff]
          %v2033 = vld [vmem:[%s5 + $0x108] sm:$0xff]
          %v2034 = vld [vmem:[%s5 + $0x110] sm:$0xff]
          %v2035 = vld [vmem:[%s5 + $0x118] sm:$0xff]
          %v2036 = vld [vmem:[%s5 + $0x120] sm:$0xff]
          %v2037 = vld [vmem:[%s5 + $0x128] sm:$0xff]
          %v2038 = vld [vmem:[%s5 + $0x130] sm:$0xff]
          %v2039 = vld [vmem:[%s5 + $0x138] sm:$0xff]
          %v2040 = vld [vmem:[%s5 + $0x140] sm:$0xff]
          %v2041 = vld [vmem:[%s5 + $0x148] sm:$0xff]
          %v2042 = vld [vmem:[%s5 + $0x150] sm:$0xff]
          %v2043 = vld [vmem:[%s5 + $0x158] sm:$0xff]
          %v2044 = vld [vmem:[%s5 + $0x160] sm:$0xff]
          %v2045 = vld [vmem:[%s5 + $0x168] sm:$0xff]
          %v2046 = vld [vmem:[%s5 + $0x170] sm:$0xff]
          %v2047 = vld [vmem:[%s5 + $0x178] sm:$0xff]
          %v2048 = vld [vmem:[%s5 + $0x180] sm:$0xff]
          %v2049 = vld [vmem:[%s5 + $0x188] sm:$0xff]
          %v2050 = vld [vmem:[%s5 + $0x190] sm:$0xff]
          %v2051 = vld [vmem:[%s5 + $0x198] sm:$0xff]
          %v2052 = vld [vmem:[%s5 + $0x1a0] sm:$0xff]
          %v2053 = vld [vmem:[%s5 + $0x1a8] sm:$0xff]
          %v2054 = vld [vmem:[%s5 + $0x1b0] sm:$0xff]
          %v2055 = vld [vmem:[%s5 + $0x1b8] sm:$0xff]
          %v2056 = vld [vmem:[%s5 + $0x1c0] sm:$0xff]
          %v2057 = vld [vmem:[%s5 + $0x1c8] sm:$0xff]
          %v2058 = vld [vmem:[%s5 + $0x1d0] sm:$0xff]
          %v2059 = vld [vmem:[%s5 + $0x1d8] sm:$0xff]
          %v2060 = vld [vmem:[%s5 + $0x1e0] sm:$0xff]
          %v2061 = vld [vmem:[%s5 + $0x1e8] sm:$0xff]
          %v2062 = vld [vmem:[%s5 + $0x1f0] sm:$0xff]
          %v2063 = vld [vmem:[%s5 + $0x1f8] sm:$0xff]
          %v2064 = vld [vmem:[%s5 + $0x200] sm:$0xff]
          %v2065 = vld [vmem:[%s5 + $0x208] sm:$0xff]
          %v2066 = vld [vmem:[%s5 + $0x210] sm:$0xff]
          %v2067 = vld [vmem:[%s5 + $0x218] sm:$0xff]
          %v2068 = vld [vmem:[%s5 + $0x220] sm:$0xff]
          %v2069 = vld [vmem:[%s5 + $0x228] sm:$0xff]
          %v2070 = vld [vmem:[%s5 + $0x230] sm:$0xff]
          %v2071 = vld [vmem:[%s5 + $0x238] sm:$0xff]
          %v2072 = vld [vmem:[%s5 + $0x240] sm:$0xff]
          %v2073 = vld [vmem:[%s5 + $0x248] sm:$0xff]
          %v2074 = vld [vmem:[%s5 + $0x250] sm:$0xff]
          %v2075 = vld [vmem:[%s5 + $0x258] sm:$0xff]
          %v2076 = vld [vmem:[%s5 + $0x260] sm:$0xff]
          %v2077 = vld [vmem:[%s5 + $0x268] sm:$0xff]
          %v2078 = vld [vmem:[%s5 + $0x270] sm:$0xff]
          %v2079 = vld [vmem:[%s5 + $0x278] sm:$0xff]
          %v2080 = vld [vmem:[%s5 + $0x280] sm:$0xff]
          %v2081 = vld [vmem:[%s5 + $0x288] sm:$0xff]
          %v2082 = vld [vmem:[%s5 + $0x290] sm:$0xff]
          %v2083 = vld [vmem:[%s5 + $0x298] sm:$0xff]
          %v2084 = vld [vmem:[%s5 + $0x2a0] sm:$0xff]
          %v2085 = vld [vmem:[%s5 + $0x2a8] sm:$0xff]
          %v2086 = vld [vmem:[%s5 + $0x2b0] sm:$0xff]
          %v2087 = vld [vmem:[%s5 + $0x2b8] sm:$0xff]
          %v2088 = vld [vmem:[%s5 + $0x2c0] sm:$0xff]
          %v2089 = vld [vmem:[%s5 + $0x2c8] sm:$0xff]
          %v2090 = vld [vmem:[%s5 + $0x2d0] sm:$0xff]
          %v2091 = vld [vmem:[%s5 + $0x2d8] sm:$0xff]
          %v2092 = vld [vmem:[%s5 + $0x2e0] sm:$0xff]
          %v2093 = vld [vmem:[%s5 + $0x2e8] sm:$0xff]
          %v2094 = vld [vmem:[%s5 + $0x2f0] sm:$0xff]
          %v2095 = vld [vmem:[%s5 + $0x2f8] sm:$0xff]
          %v2096 = vld [vmem:[%s5 + $0x300] sm:$0xff]
          %v2097 = vld [vmem:[%s5 + $0x308] sm:$0xff]
          %v2098 = vld [vmem:[%s5 + $0x310] sm:$0xff]
          %v2099 = vld [vmem:[%s5 + $0x318] sm:$0xff]
          %v2100 = vld [vmem:[%s5 + $0x320] sm:$0xff]
          %v2101 = vld [vmem:[%s5 + $0x328] sm:$0xff]
          %v2102 = vld [vmem:[%s5 + $0x330] sm:$0xff]
          %v2103 = vld [vmem:[%s5 + $0x338] sm:$0xff]
          %v2104 = vld [vmem:[%s5 + $0x340] sm:$0xff]
          %v2105 = vld [vmem:[%s5 + $0x348] sm:$0xff]
          %v2106 = vld [vmem:[%s5 + $0x350] sm:$0xff]
          %v2107 = vld [vmem:[%s5 + $0x358] sm:$0xff]
          %v2108 = vld [vmem:[%s5 + $0x360] sm:$0xff]
          %v2109 = vld [vmem:[%s5 + $0x368] sm:$0xff]
          %v2110 = vld [vmem:[%s5 + $0x370] sm:$0xff]
          %v2111 = vld [vmem:[%s5 + $0x378] sm:$0xff]
          %v2112 = vld [vmem:[%s5 + $0x380] sm:$0xff]
          %v2113 = vld [vmem:[%s5 + $0x388] sm:$0xff]
          %v2114 = vld [vmem:[%s5 + $0x390] sm:$0xff]
          %v2115 = vld [vmem:[%s5 + $0x398] sm:$0xff]
          %v2116 = vld [vmem:[%s5 + $0x3a0] sm:$0xff]
          %v2117 = vld [vmem:[%s5 + $0x3a8] sm:$0xff]
          %v2118 = vld [vmem:[%s5 + $0x3b0] sm:$0xff]
          %v2119 = vld [vmem:[%s5 + $0x3b8] sm:$0xff]
          %v2120 = vld [vmem:[%s5 + $0x3c0] sm:$0xff]
          %v2121 = vld [vmem:[%s5 + $0x3c8] sm:$0xff]
          %v2122 = vld [vmem:[%s5 + $0x3d0] sm:$0xff]
          %v2123 = vld [vmem:[%s5 + $0x3d8] sm:$0xff]
          %v2124 = vld [vmem:[%s5 + $0x3e0] sm:$0xff]
          %v2125 = vld [vmem:[%s5 + $0x3e8] sm:$0xff]
          %v2126 = vld [vmem:[%s5 + $0x3f0] sm:$0xff]
          %v2127 = vld [vmem:[%s5 + $0x3f8] sm:$0xff]
          %v2128 = vld [vmem:[%s5 + $0x400] sm:$0xff]
          %v2129 = vld [vmem:[%s5 + $0x408] sm:$0xff]
          %v2130 = vld [vmem:[%s5 + $0x410] sm:$0xff]
          %v2131 = vld [vmem:[%s5 + $0x418] sm:$0xff]
          %v2132 = vld [vmem:[%s5 + $0x420] sm:$0xff]
          %v2133 = vld [vmem:[%s5 + $0x428] sm:$0xff]
          %v2134 = vld [vmem:[%s5 + $0x430] sm:$0xff]
          %v2135 = vld [vmem:[%s5 + $0x438] sm:$0xff]
          %v2136 = vld [vmem:[%s5 + $0x440] sm:$0xff]
          %v2137 = vld [vmem:[%s5 + $0x448] sm:$0xff]
          %v2138 = vld [vmem:[%s5 + $0x450] sm:$0xff]
          %v2139 = vld [vmem:[%s5 + $0x458] sm:$0xff]
          %v2140 = vld [vmem:[%s5 + $0x460] sm:$0xff]
          %v2141 = vld [vmem:[%s5 + $0x468] sm:$0xff]
          %v2142 = vld [vmem:[%s5 + $0x470] sm:$0xff]
          %v2143 = vld [vmem:[%s5 + $0x478] sm:$0xff]
          %v2144 = vld [vmem:[%s5 + $0x480] sm:$0xff]
          %v2145 = vld [vmem:[%s5 + $0x488] sm:$0xff]
          %v2146 = vld [vmem:[%s5 + $0x490] sm:$0xff]
          %v2147 = vld [vmem:[%s5 + $0x498] sm:$0xff]
          %v2148 = vld [vmem:[%s5 + $0x4a0] sm:$0xff]
          %v2149 = vld [vmem:[%s5 + $0x4a8] sm:$0xff]
          %v2150 = vld [vmem:[%s6] sm:$0x3]
          %v2152 = vlaneseq
          %v2153 = vshrl.u32 %v2152, 7
          %v2154 = vsub.s32 0, %v2153
          %v2155 = vrot.slane %v2150, %v2154
          %v2156 = vlaneseq
          %v2157 = vshrl.u32 %v2156, 7
          %v2158 = vsub.s32 1, %v2157
          %v2159 = vrot.slane %v2150, %v2158
          %v2312 = vunpack.c.l.b16 %v2000
          %v2313 = vunpack.c.h.b16 %v2000
          %v2314 = vunpack.c.l.b16 %v2001
          %v2315 = vunpack.c.h.b16 %v2001
          %v2316 = vunpack.c.l.b16 %v2002
          %v2317 = vunpack.c.h.b16 %v2002
          %v2318 = vunpack.c.l.b16 %v2003
          %v2319 = vunpack.c.h.b16 %v2003
          %v2320 = vunpack.c.l.b16 %v2004
          %v2321 = vunpack.c.h.b16 %v2004
          %v2322 = vunpack.c.l.b16 %v2005
          %v2323 = vunpack.c.h.b16 %v2005
          %v2324 = vunpack.c.l.b16 %v2006
          %v2325 = vunpack.c.h.b16 %v2006
          %v2326 = vunpack.c.l.b16 %v2007
          %v2327 = vunpack.c.h.b16 %v2007
          %v2328 = vunpack.c.l.b16 %v2008
          %v2329 = vunpack.c.h.b16 %v2008
          %v2330 = vunpack.c.l.b16 %v2009
          %v2331 = vunpack.c.h.b16 %v2009
          %v2332 = vunpack.c.l.b16 %v2010
          %v2333 = vunpack.c.h.b16 %v2010
          %v2334 = vunpack.c.l.b16 %v2011
          %v2335 = vunpack.c.h.b16 %v2011
          %v2336 = vunpack.c.l.b16 %v2012
          %v2337 = vunpack.c.h.b16 %v2012
          %v2338 = vunpack.c.l.b16 %v2013
          %v2339 = vunpack.c.h.b16 %v2013
          %v2340 = vunpack.c.l.b16 %v2014
          %v2341 = vunpack.c.h.b16 %v2014
          %v2342 = vunpack.c.l.b16 %v2015
          %v2343 = vunpack.c.h.b16 %v2015
          %v2344 = vunpack.c.l.b16 %v2016
          %v2345 = vunpack.c.h.b16 %v2016
          %v2346 = vunpack.c.l.b16 %v2017
          %v2347 = vunpack.c.h.b16 %v2017
          %v2348 = vunpack.c.l.b16 %v2018
          %v2349 = vunpack.c.h.b16 %v2018
          %v2350 = vunpack.c.l.b16 %v2019
          %v2351 = vunpack.c.h.b16 %v2019
          %v2352 = vunpack.c.l.b16 %v2020
          %v2353 = vunpack.c.h.b16 %v2020
          %v2354 = vunpack.c.l.b16 %v2021
          %v2355 = vunpack.c.h.b16 %v2021
          %v2356 = vunpack.c.l.b16 %v2022
          %v2357 = vunpack.c.h.b16 %v2022
          %v2358 = vunpack.c.l.b16 %v2023
          %v2359 = vunpack.c.h.b16 %v2023
          %v2360 = vunpack.c.l.b16 %v2024
          %v2361 = vunpack.c.h.b16 %v2024
          %v2362 = vunpack.c.l.b16 %v2025
          %v2363 = vunpack.c.h.b16 %v2025
          %v2364 = vunpack.c.l.b16 %v2026
          %v2365 = vunpack.c.h.b16 %v2026
          %v2366 = vunpack.c.l.b16 %v2027
          %v2367 = vunpack.c.h.b16 %v2027
          %v2368 = vunpack.c.l.b16 %v2028
          %v2369 = vunpack.c.h.b16 %v2028
          %v2370 = vunpack.c.l.b16 %v2029
          %v2371 = vunpack.c.h.b16 %v2029
          %v2372 = vunpack.c.l.b16 %v2030
          %v2373 = vunpack.c.h.b16 %v2030
          %v2374 = vunpack.c.l.b16 %v2031
          %v2375 = vunpack.c.h.b16 %v2031
          %v2376 = vunpack.c.l.b16 %v2032
          %v2377 = vunpack.c.h.b16 %v2032
          %v2378 = vunpack.c.l.b16 %v2033
          %v2379 = vunpack.c.h.b16 %v2033
          %v2380 = vunpack.c.l.b16 %v2034
          %v2381 = vunpack.c.h.b16 %v2034
          %v2382 = vunpack.c.l.b16 %v2035
          %v2383 = vunpack.c.h.b16 %v2035
          %v2384 = vunpack.c.l.b16 %v2036
          %v2385 = vunpack.c.h.b16 %v2036
          %v2386 = vunpack.c.l.b16 %v2037
          %v2387 = vunpack.c.h.b16 %v2037
          %v2388 = vunpack.c.l.b16 %v2038
          %v2389 = vunpack.c.h.b16 %v2038
          %v2390 = vunpack.c.l.b16 %v2039
          %v2391 = vunpack.c.h.b16 %v2039
          %v2392 = vunpack.c.l.b16 %v2040
          %v2393 = vunpack.c.h.b16 %v2040
          %v2394 = vunpack.c.l.b16 %v2041
          %v2395 = vunpack.c.h.b16 %v2041
          %v2396 = vunpack.c.l.b16 %v2042
          %v2397 = vunpack.c.h.b16 %v2042
          %v2398 = vunpack.c.l.b16 %v2043
          %v2399 = vunpack.c.h.b16 %v2043
          %v2400 = vunpack.c.l.b16 %v2044
          %v2401 = vunpack.c.h.b16 %v2044
          %v2402 = vunpack.c.l.b16 %v2045
          %v2403 = vunpack.c.h.b16 %v2045
          %v2404 = vunpack.c.l.b16 %v2046
          %v2405 = vunpack.c.h.b16 %v2046
          %v2406 = vunpack.c.l.b16 %v2047
          %v2407 = vunpack.c.h.b16 %v2047
          %v2408 = vunpack.c.l.b16 %v2048
          %v2409 = vunpack.c.h.b16 %v2048
          %v2410 = vunpack.c.l.b16 %v2049
          %v2411 = vunpack.c.h.b16 %v2049
          %v2412 = vunpack.c.l.b16 %v2050
          %v2413 = vunpack.c.h.b16 %v2050
          %v2414 = vunpack.c.l.b16 %v2051
          %v2415 = vunpack.c.h.b16 %v2051
          %v2416 = vunpack.c.l.b16 %v2052
          %v2417 = vunpack.c.h.b16 %v2052
          %v2418 = vunpack.c.l.b16 %v2053
          %v2419 = vunpack.c.h.b16 %v2053
          %v2420 = vunpack.c.l.b16 %v2054
          %v2421 = vunpack.c.h.b16 %v2054
          %v2422 = vunpack.c.l.b16 %v2055
          %v2423 = vunpack.c.h.b16 %v2055
          %v2424 = vunpack.c.l.b16 %v2056
          %v2425 = vunpack.c.h.b16 %v2056
          %v2426 = vunpack.c.l.b16 %v2057
          %v2427 = vunpack.c.h.b16 %v2057
          %v2428 = vunpack.c.l.b16 %v2058
          %v2429 = vunpack.c.h.b16 %v2058
          %v2430 = vunpack.c.l.b16 %v2059
          %v2431 = vunpack.c.h.b16 %v2059
          %v2432 = vunpack.c.l.b16 %v2060
          %v2433 = vunpack.c.h.b16 %v2060
          %v2434 = vunpack.c.l.b16 %v2061
          %v2435 = vunpack.c.h.b16 %v2061
          %v2436 = vunpack.c.l.b16 %v2062
          %v2437 = vunpack.c.h.b16 %v2062
          %v2438 = vunpack.c.l.b16 %v2063
          %v2439 = vunpack.c.h.b16 %v2063
          %v2440 = vunpack.c.l.b16 %v2064
          %v2441 = vunpack.c.h.b16 %v2064
          %v2442 = vunpack.c.l.b16 %v2065
          %v2443 = vunpack.c.h.b16 %v2065
          %v2444 = vunpack.c.l.b16 %v2066
          %v2445 = vunpack.c.h.b16 %v2066
          %v2446 = vunpack.c.l.b16 %v2067
          %v2447 = vunpack.c.h.b16 %v2067
          %v2448 = vunpack.c.l.b16 %v2068
          %v2449 = vunpack.c.h.b16 %v2068
          %v2450 = vunpack.c.l.b16 %v2069
          %v2451 = vunpack.c.h.b16 %v2069
          %v2452 = vunpack.c.l.b16 %v2070
          %v2453 = vunpack.c.h.b16 %v2070
          %v2454 = vunpack.c.l.b16 %v2071
          %v2455 = vunpack.c.h.b16 %v2071
          %v2456 = vunpack.c.l.b16 %v2072
          %v2457 = vunpack.c.h.b16 %v2072
          %v2458 = vunpack.c.l.b16 %v2073
          %v2459 = vunpack.c.h.b16 %v2073
          %v2460 = vunpack.c.l.b16 %v2074
          %v2461 = vunpack.c.h.b16 %v2074
          %v2462 = vunpack.c.l.b16 %v2075
          %v2463 = vunpack.c.h.b16 %v2075
          %v2464 = vunpack.c.l.b16 %v2076
          %v2465 = vunpack.c.h.b16 %v2076
          %v2466 = vunpack.c.l.b16 %v2077
          %v2467 = vunpack.c.h.b16 %v2077
          %v2468 = vunpack.c.l.b16 %v2078
          %v2469 = vunpack.c.h.b16 %v2078
          %v2470 = vunpack.c.l.b16 %v2079
          %v2471 = vunpack.c.h.b16 %v2079
          %v2472 = vunpack.c.l.b16 %v2080
          %v2473 = vunpack.c.h.b16 %v2080
          %v2474 = vunpack.c.l.b16 %v2081
          %v2475 = vunpack.c.h.b16 %v2081
          %v2476 = vunpack.c.l.b16 %v2082
          %v2477 = vunpack.c.h.b16 %v2082
          %v2478 = vunpack.c.l.b16 %v2083
          %v2479 = vunpack.c.h.b16 %v2083
          %v2480 = vunpack.c.l.b16 %v2084
          %v2481 = vunpack.c.h.b16 %v2084
          %v2482 = vunpack.c.l.b16 %v2085
          %v2483 = vunpack.c.h.b16 %v2085
          %v2484 = vunpack.c.l.b16 %v2086
          %v2485 = vunpack.c.h.b16 %v2086
          %v2486 = vunpack.c.l.b16 %v2087
          %v2487 = vunpack.c.h.b16 %v2087
          %v2488 = vunpack.c.l.b16 %v2088
          %v2489 = vunpack.c.h.b16 %v2088
          %v2490 = vunpack.c.l.b16 %v2089
          %v2491 = vunpack.c.h.b16 %v2089
          %v2492 = vunpack.c.l.b16 %v2090
          %v2493 = vunpack.c.h.b16 %v2090
          %v2494 = vunpack.c.l.b16 %v2091
          %v2495 = vunpack.c.h.b16 %v2091
          %v2496 = vunpack.c.l.b16 %v2092
          %v2497 = vunpack.c.h.b16 %v2092
          %v2498 = vunpack.c.l.b16 %v2093
          %v2499 = vunpack.c.h.b16 %v2093
          %v2500 = vunpack.c.l.b16 %v2094
          %v2501 = vunpack.c.h.b16 %v2094
          %v2502 = vunpack.c.l.b16 %v2095
          %v2503 = vunpack.c.h.b16 %v2095
          %v2504 = vunpack.c.l.b16 %v2096
          %v2505 = vunpack.c.h.b16 %v2096
          %v2506 = vunpack.c.l.b16 %v2097
          %v2507 = vunpack.c.h.b16 %v2097
          %v2508 = vunpack.c.l.b16 %v2098
          %v2509 = vunpack.c.h.b16 %v2098
          %v2510 = vunpack.c.l.b16 %v2099
          %v2511 = vunpack.c.h.b16 %v2099
          %v2512 = vunpack.c.l.b16 %v2100
          %v2513 = vunpack.c.h.b16 %v2100
          %v2514 = vunpack.c.l.b16 %v2101
          %v2515 = vunpack.c.h.b16 %v2101
          %v2516 = vunpack.c.l.b16 %v2102
          %v2517 = vunpack.c.h.b16 %v2102
          %v2518 = vunpack.c.l.b16 %v2103
          %v2519 = vunpack.c.h.b16 %v2103
          %v2520 = vunpack.c.l.b16 %v2104
          %v2521 = vunpack.c.h.b16 %v2104
          %v2522 = vunpack.c.l.b16 %v2105
          %v2523 = vunpack.c.h.b16 %v2105
          %v2524 = vunpack.c.l.b16 %v2106
          %v2525 = vunpack.c.h.b16 %v2106
          %v2526 = vunpack.c.l.b16 %v2107
          %v2527 = vunpack.c.h.b16 %v2107
          %v2528 = vunpack.c.l.b16 %v2108
          %v2529 = vunpack.c.h.b16 %v2108
          %v2530 = vunpack.c.l.b16 %v2109
          %v2531 = vunpack.c.h.b16 %v2109
          %v2532 = vunpack.c.l.b16 %v2110
          %v2533 = vunpack.c.h.b16 %v2110
          %v2534 = vunpack.c.l.b16 %v2111
          %v2535 = vunpack.c.h.b16 %v2111
          %v2536 = vunpack.c.l.b16 %v2112
          %v2537 = vunpack.c.h.b16 %v2112
          %v2538 = vunpack.c.l.b16 %v2113
          %v2539 = vunpack.c.h.b16 %v2113
          %v2540 = vunpack.c.l.b16 %v2114
          %v2541 = vunpack.c.h.b16 %v2114
          %v2542 = vunpack.c.l.b16 %v2115
          %v2543 = vunpack.c.h.b16 %v2115
          %v2544 = vunpack.c.l.b16 %v2116
          %v2545 = vunpack.c.h.b16 %v2116
          %v2546 = vunpack.c.l.b16 %v2117
          %v2547 = vunpack.c.h.b16 %v2117
          %v2548 = vunpack.c.l.b16 %v2118
          %v2549 = vunpack.c.h.b16 %v2118
          %v2550 = vunpack.c.l.b16 %v2119
          %v2551 = vunpack.c.h.b16 %v2119
          %v2552 = vunpack.c.l.b16 %v2120
          %v2553 = vunpack.c.h.b16 %v2120
          %v2554 = vunpack.c.l.b16 %v2121
          %v2555 = vunpack.c.h.b16 %v2121
          %v2556 = vunpack.c.l.b16 %v2122
          %v2557 = vunpack.c.h.b16 %v2122
          %v2558 = vunpack.c.l.b16 %v2123
          %v2559 = vunpack.c.h.b16 %v2123
          %v2560 = vunpack.c.l.b16 %v2124
          %v2561 = vunpack.c.h.b16 %v2124
          %v2562 = vunpack.c.l.b16 %v2125
          %v2563 = vunpack.c.h.b16 %v2125
          %v2564 = vunpack.c.l.b16 %v2126
          %v2565 = vunpack.c.h.b16 %v2126
          %v2566 = vunpack.c.l.b16 %v2127
          %v2567 = vunpack.c.h.b16 %v2127
          %v2568 = vunpack.c.l.b16 %v2128
          %v2569 = vunpack.c.h.b16 %v2128
          %v2570 = vunpack.c.l.b16 %v2129
          %v2571 = vunpack.c.h.b16 %v2129
          %v2572 = vunpack.c.l.b16 %v2130
          %v2573 = vunpack.c.h.b16 %v2130
          %v2574 = vunpack.c.l.b16 %v2131
          %v2575 = vunpack.c.h.b16 %v2131
          %v2576 = vunpack.c.l.b16 %v2132
          %v2577 = vunpack.c.h.b16 %v2132
          %v2578 = vunpack.c.l.b16 %v2133
          %v2579 = vunpack.c.h.b16 %v2133
          %v2580 = vunpack.c.l.b16 %v2134
          %v2581 = vunpack.c.h.b16 %v2134
          %v2582 = vunpack.c.l.b16 %v2135
          %v2583 = vunpack.c.h.b16 %v2135
          %v2584 = vunpack.c.l.b16 %v2136
          %v2585 = vunpack.c.h.b16 %v2136
          %v2586 = vunpack.c.l.b16 %v2137
          %v2587 = vunpack.c.h.b16 %v2137
          %v2588 = vunpack.c.l.b16 %v2138
          %v2589 = vunpack.c.h.b16 %v2138
          %v2590 = vunpack.c.l.b16 %v2139
          %v2591 = vunpack.c.h.b16 %v2139
          %v2592 = vunpack.c.l.b16 %v2140
          %v2593 = vunpack.c.h.b16 %v2140
          %v2594 = vunpack.c.l.b16 %v2141
          %v2595 = vunpack.c.h.b16 %v2141
          %v2596 = vunpack.c.l.b16 %v2142
          %v2597 = vunpack.c.h.b16 %v2142
          %v2598 = vunpack.c.l.b16 %v2143
          %v2599 = vunpack.c.h.b16 %v2143
          %v2600 = vunpack.c.l.b16 %v2144
          %v2601 = vunpack.c.h.b16 %v2144
          %v2602 = vunpack.c.l.b16 %v2145
          %v2603 = vunpack.c.h.b16 %v2145
          %v2604 = vunpack.c.l.b16 %v2146
          %v2605 = vunpack.c.h.b16 %v2146
          %v2606 = vunpack.c.l.b16 %v2147
          %v2607 = vunpack.c.h.b16 %v2147
          %v2608 = vunpack.c.l.b16 %v2148
          %v2609 = vunpack.c.h.b16 %v2148
          %v2610 = vunpack.c.l.b16 %v2149
          %v2611 = vunpack.c.h.b16 %v2149
          %v2612 = vpack.c.b16 %v2314, %v2312
          %v2613 = vpack.c.b16 %v2315, %v2313
          %v2614 = vpack.c.b16 %v2318, %v2316
          %v2615 = vpack.c.b16 %v2319, %v2317
          %v2616 = vpack.c.b16 %v2322, %v2320
          %v2617 = vpack.c.b16 %v2323, %v2321
          %v2618 = vpack.c.b16 %v2326, %v2324
          %v2619 = vpack.c.b16 %v2327, %v2325
          %v2620 = vpack.c.b16 %v2330, %v2328
          %v2621 = vpack.c.b16 %v2331, %v2329
          %v2622 = vpack.c.b16 %v2334, %v2332
          %v2623 = vpack.c.b16 %v2335, %v2333
          %v2624 = vpack.c.b16 %v2338, %v2336
          %v2625 = vpack.c.b16 %v2339, %v2337
          %v2626 = vpack.c.b16 %v2342, %v2340
          %v2627 = vpack.c.b16 %v2343, %v2341
          %v2628 = vpack.c.b16 %v2346, %v2344
          %v2629 = vpack.c.b16 %v2347, %v2345
          %v2630 = vpack.c.b16 %v2350, %v2348
          %v2631 = vpack.c.b16 %v2351, %v2349
          %v2632 = vpack.c.b16 %v2354, %v2352
          %v2633 = vpack.c.b16 %v2355, %v2353
          %v2634 = vpack.c.b16 %v2358, %v2356
          %v2635 = vpack.c.b16 %v2359, %v2357
          %v2636 = vpack.c.b16 %v2362, %v2360
          %v2637 = vpack.c.b16 %v2363, %v2361
          %v2638 = vpack.c.b16 %v2366, %v2364
          %v2639 = vpack.c.b16 %v2367, %v2365
          %v2640 = vpack.c.b16 %v2370, %v2368
          %v2641 = vpack.c.b16 %v2371, %v2369
          %v2642 = vpack.c.b16 %v2374, %v2372
          %v2643 = vpack.c.b16 %v2375, %v2373
          %v2644 = vpack.c.b16 %v2378, %v2376
          %v2645 = vpack.c.b16 %v2379, %v2377
          %v2646 = vpack.c.b16 %v2382, %v2380
          %v2647 = vpack.c.b16 %v2383, %v2381
          %v2648 = vpack.c.b16 %v2386, %v2384
          %v2649 = vpack.c.b16 %v2387, %v2385
          %v2650 = vpack.c.b16 %v2390, %v2388
          %v2651 = vpack.c.b16 %v2391, %v2389
          %v2652 = vpack.c.b16 %v2394, %v2392
          %v2653 = vpack.c.b16 %v2395, %v2393
          %v2654 = vpack.c.b16 %v2398, %v2396
          %v2655 = vpack.c.b16 %v2399, %v2397
          %v2656 = vpack.c.b16 %v2402, %v2400
          %v2657 = vpack.c.b16 %v2403, %v2401
          %v2658 = vpack.c.b16 %v2406, %v2404
          %v2659 = vpack.c.b16 %v2407, %v2405
          %v2660 = vpack.c.b16 %v2410, %v2408
          %v2661 = vpack.c.b16 %v2411, %v2409
          %v2662 = vpack.c.b16 %v2414, %v2412
          %v2663 = vpack.c.b16 %v2415, %v2413
          %v2664 = vpack.c.b16 %v2418, %v2416
          %v2665 = vpack.c.b16 %v2419, %v2417
          %v2666 = vpack.c.b16 %v2422, %v2420
          %v2667 = vpack.c.b16 %v2423, %v2421
          %v2668 = vpack.c.b16 %v2426, %v2424
          %v2669 = vpack.c.b16 %v2427, %v2425
          %v2670 = vpack.c.b16 %v2430, %v2428
          %v2671 = vpack.c.b16 %v2431, %v2429
          %v2672 = vpack.c.b16 %v2434, %v2432
          %v2673 = vpack.c.b16 %v2435, %v2433
          %v2674 = vpack.c.b16 %v2438, %v2436
          %v2675 = vpack.c.b16 %v2439, %v2437
          %v2676 = vpack.c.b16 %v2442, %v2440
          %v2677 = vpack.c.b16 %v2443, %v2441
          %v2678 = vpack.c.b16 %v2446, %v2444
          %v2679 = vpack.c.b16 %v2447, %v2445
          %v2680 = vpack.c.b16 %v2450, %v2448
          %v2681 = vpack.c.b16 %v2451, %v2449
          %v2682 = vpack.c.b16 %v2454, %v2452
          %v2683 = vpack.c.b16 %v2455, %v2453
          %v2684 = vpack.c.b16 %v2458, %v2456
          %v2685 = vpack.c.b16 %v2459, %v2457
          %v2686 = vpack.c.b16 %v2462, %v2460
          %v2687 = vpack.c.b16 %v2463, %v2461
          %v2688 = vpack.c.b16 %v2466, %v2464
          %v2689 = vpack.c.b16 %v2467, %v2465
          %v2690 = vpack.c.b16 %v2470, %v2468
          %v2691 = vpack.c.b16 %v2471, %v2469
          %v2692 = vpack.c.b16 %v2474, %v2472
          %v2693 = vpack.c.b16 %v2475, %v2473
          %v2694 = vpack.c.b16 %v2478, %v2476
          %v2695 = vpack.c.b16 %v2479, %v2477
          %v2696 = vpack.c.b16 %v2482, %v2480
          %v2697 = vpack.c.b16 %v2483, %v2481
          %v2698 = vpack.c.b16 %v2486, %v2484
          %v2699 = vpack.c.b16 %v2487, %v2485
          %v2700 = vpack.c.b16 %v2490, %v2488
          %v2701 = vpack.c.b16 %v2491, %v2489
          %v2702 = vpack.c.b16 %v2494, %v2492
          %v2703 = vpack.c.b16 %v2495, %v2493
          %v2704 = vpack.c.b16 %v2498, %v2496
          %v2705 = vpack.c.b16 %v2499, %v2497
          %v2706 = vpack.c.b16 %v2502, %v2500
          %v2707 = vpack.c.b16 %v2503, %v2501
          %v2708 = vpack.c.b16 %v2506, %v2504
          %v2709 = vpack.c.b16 %v2507, %v2505
          %v2710 = vpack.c.b16 %v2510, %v2508
          %v2711 = vpack.c.b16 %v2511, %v2509
          %v2712 = vpack.c.b16 %v2514, %v2512
          %v2713 = vpack.c.b16 %v2515, %v2513
          %v2714 = vpack.c.b16 %v2518, %v2516
          %v2715 = vpack.c.b16 %v2519, %v2517
          %v2716 = vpack.c.b16 %v2522, %v2520
          %v2717 = vpack.c.b16 %v2523, %v2521
          %v2718 = vpack.c.b16 %v2526, %v2524
          %v2719 = vpack.c.b16 %v2527, %v2525
          %v2720 = vpack.c.b16 %v2530, %v2528
          %v2721 = vpack.c.b16 %v2531, %v2529
          %v2722 = vpack.c.b16 %v2534, %v2532
          %v2723 = vpack.c.b16 %v2535, %v2533
          %v2724 = vpack.c.b16 %v2538, %v2536
          %v2725 = vpack.c.b16 %v2539, %v2537
          %v2726 = vpack.c.b16 %v2542, %v2540
          %v2727 = vpack.c.b16 %v2543, %v2541
          %v2728 = vpack.c.b16 %v2546, %v2544
          %v2729 = vpack.c.b16 %v2547, %v2545
          %v2730 = vpack.c.b16 %v2550, %v2548
          %v2731 = vpack.c.b16 %v2551, %v2549
          %v2732 = vpack.c.b16 %v2554, %v2552
          %v2733 = vpack.c.b16 %v2555, %v2553
          %v2734 = vpack.c.b16 %v2558, %v2556
          %v2735 = vpack.c.b16 %v2559, %v2557
          %v2736 = vpack.c.b16 %v2562, %v2560
          %v2737 = vpack.c.b16 %v2563, %v2561
          %v2738 = vpack.c.b16 %v2566, %v2564
          %v2739 = vpack.c.b16 %v2567, %v2565
          %v2740 = vpack.c.b16 %v2570, %v2568
          %v2741 = vpack.c.b16 %v2571, %v2569
          %v2742 = vpack.c.b16 %v2574, %v2572
          %v2743 = vpack.c.b16 %v2575, %v2573
          %v2744 = vpack.c.b16 %v2578, %v2576
          %v2745 = vpack.c.b16 %v2579, %v2577
          %v2746 = vpack.c.b16 %v2582, %v2580
          %v2747 = vpack.c.b16 %v2583, %v2581
          %v2748 = vpack.c.b16 %v2586, %v2584
          %v2749 = vpack.c.b16 %v2587, %v2585
          %v2750 = vpack.c.b16 %v2590, %v2588
          %v2751 = vpack.c.b16 %v2591, %v2589
          %v2752 = vpack.c.b16 %v2594, %v2592
          %v2753 = vpack.c.b16 %v2595, %v2593
          %v2754 = vpack.c.b16 %v2598, %v2596
          %v2755 = vpack.c.b16 %v2599, %v2597
          %v2756 = vpack.c.b16 %v2602, %v2600
          %v2757 = vpack.c.b16 %v2603, %v2601
          %v2758 = vpack.c.b16 %v2606, %v2604
          %v2759 = vpack.c.b16 %v2607, %v2605
          %v2760 = vpack.c.b16 %v2610, %v2608
          %v2761 = vpack.c.b16 %v2611, %v2609
          %vm2912 = vcmask 392192
          %v2914 = vsel %vm2912, %v1999, 0
          %2916 = vmatprep.subr.bf16.mxu0 %v2627
          %2917 = vmatpush1.bf16.msra.mxu0 %v2626
          %2918 = vmatprep.subr.bf16.mxu0 %v2625
          %2919 = vmatpush1.bf16.msra.mxu0 %v2624
          %2920 = vmatprep.subr.bf16.mxu0 %v2623
          %2921 = vmatpush1.bf16.msra.mxu0 %v2622
          %2922 = vmatprep.subr.bf16.mxu0 %v2621
          %2923 = vmatpush1.bf16.msra.mxu0 %v2620
          %2924 = vmatprep.subr.bf16.mxu0 %v2619
          %2925 = vmatpush1.bf16.msra.mxu0 %v2618
          %2926 = vmatprep.subr.bf16.mxu0 %v2617
          %2927 = vmatpush1.bf16.msra.mxu0 %v2616
          %2928 = vmatprep.subr.bf16.mxu0 %v2615
          %2929 = vmatpush1.bf16.msra.mxu0 %v2614
          %2930 = vmatprep.subr.bf16.mxu0 %v2613
          %2931 = vmatpush1.bf16.msra.mxu0 %v2612
          %2932 = vmatprep.subr.bf16.mxu0 %v2643
          %2933 = vmatpush2.bf16.msra.mxu0 %v2642
          %2934 = vmatprep.subr.bf16.mxu0 %v2641
          %2935 = vmatpush2.bf16.msra.mxu0 %v2640
          %2936 = vmatprep.subr.bf16.mxu0 %v2639
          %2937 = vmatpush2.bf16.msra.mxu0 %v2638
          %2938 = vmatprep.subr.bf16.mxu0 %v2637
          %2939 = vmatpush2.bf16.msra.mxu0 %v2636
          %2940 = vmatprep.subr.bf16.mxu0 %v2635
          %2941 = vmatpush2.bf16.msra.mxu0 %v2634
          %2942 = vmatprep.subr.bf16.mxu0 %v2633
          %2943 = vmatpush2.bf16.msra.mxu0 %v2632
          %2944 = vmatprep.subr.bf16.mxu0 %v2631
          %2945 = vmatpush2.bf16.msra.mxu0 %v2630
          %2946 = vmatprep.subr.bf16.mxu0 %v2629
          %2947 = vmatpush2.bf16.msra.mxu0 %v2628
          %2948 = vmatprep.mubr.bf16.mxu0 %v1991
          %2949 = vmatmul.mubr.bf16.gmra.mxu0 %v1990
          %v2950 = vpop.f32.mrf.mxu0
          %v2951 = vadd.f32 %v2155, %v2950
          %v2952 = vpop.f32.mrf.mxu0
          %v2953 = vadd.f32 %v2159, %v2952
          %v2954 = vpop.f32.mrf.mxu0
          %v2955 = vpop.f32.mrf.mxu0
          %2956 = vdwg.mxu0
          %2957 = vmatprep.subr.bf16.mxu0 %v2659
          %2958 = vmatpush1.bf16.msra.mxu0 %v2658
          %2959 = vmatprep.subr.bf16.mxu0 %v2657
          %2960 = vmatpush1.bf16.msra.mxu0 %v2656
          %2961 = vmatprep.subr.bf16.mxu0 %v2655
          %2962 = vmatpush1.bf16.msra.mxu0 %v2654
          %2963 = vmatprep.subr.bf16.mxu0 %v2653
          %2964 = vmatpush1.bf16.msra.mxu0 %v2652
          %2965 = vmatprep.subr.bf16.mxu0 %v2651
          %2966 = vmatpush1.bf16.msra.mxu0 %v2650
          %2967 = vmatprep.subr.bf16.mxu0 %v2649
          %2968 = vmatpush1.bf16.msra.mxu0 %v2648
          %2969 = vmatprep.subr.bf16.mxu0 %v2647
          %2970 = vmatpush1.bf16.msra.mxu0 %v2646
          %2971 = vmatprep.subr.bf16.mxu0 %v2645
          %2972 = vmatpush1.bf16.msra.mxu0 %v2644
          %2973 = vmatprep.subr.bf16.mxu0 %v2675
          %2974 = vmatpush2.bf16.msra.mxu0 %v2674
          %2975 = vmatprep.subr.bf16.mxu0 %v2673
          %2976 = vmatpush2.bf16.msra.mxu0 %v2672
          %2977 = vmatprep.subr.bf16.mxu0 %v2671
          %2978 = vmatpush2.bf16.msra.mxu0 %v2670
          %2979 = vmatprep.subr.bf16.mxu0 %v2669
          %2980 = vmatpush2.bf16.msra.mxu0 %v2668
          %2981 = vmatprep.subr.bf16.mxu0 %v2667
          %2982 = vmatpush2.bf16.msra.mxu0 %v2666
          %2983 = vmatprep.subr.bf16.mxu0 %v2665
          %2984 = vmatpush2.bf16.msra.mxu0 %v2664
          %2985 = vmatprep.subr.bf16.mxu0 %v2663
          %2986 = vmatpush2.bf16.msra.mxu0 %v2662
          %2987 = vmatprep.subr.bf16.mxu0 %v2661
          %2988 = vmatpush2.bf16.msra.mxu0 %v2660
          %2989 = vmatprep.mubr.bf16.mxu0 %v1993
          %2990 = vmatmul.mubr.bf16.gmra.mxu0 %v1992
          %v2991 = vpop.f32.mrf.mxu0
          %v2992 = vadd.f32 %v2951, %v2991
          %v2993 = vpop.f32.mrf.mxu0
          %v2994 = vadd.f32 %v2953, %v2993
          %v2995 = vpop.f32.mrf.mxu0
          %v2996 = vpop.f32.mrf.mxu0
          %2997 = vdwg.mxu0
          %2998 = vmatprep.subr.bf16.mxu0 %v2691
          %2999 = vmatpush1.bf16.msra.mxu0 %v2690
          %3000 = vmatprep.subr.bf16.mxu0 %v2689
          %3001 = vmatpush1.bf16.msra.mxu0 %v2688
          %3002 = vmatprep.subr.bf16.mxu0 %v2687
          %3003 = vmatpush1.bf16.msra.mxu0 %v2686
          %3004 = vmatprep.subr.bf16.mxu0 %v2685
          %3005 = vmatpush1.bf16.msra.mxu0 %v2684
          %3006 = vmatprep.subr.bf16.mxu0 %v2683
          %3007 = vmatpush1.bf16.msra.mxu0 %v2682
          %3008 = vmatprep.subr.bf16.mxu0 %v2681
          %3009 = vmatpush1.bf16.msra.mxu0 %v2680
          %3010 = vmatprep.subr.bf16.mxu0 %v2679
          %3011 = vmatpush1.bf16.msra.mxu0 %v2678
          %3012 = vmatprep.subr.bf16.mxu0 %v2677
          %3013 = vmatpush1.bf16.msra.mxu0 %v2676
          %3014 = vmatprep.subr.bf16.mxu0 %v2707
          %3015 = vmatpush2.bf16.msra.mxu0 %v2706
          %3016 = vmatprep.subr.bf16.mxu0 %v2705
          %3017 = vmatpush2.bf16.msra.mxu0 %v2704
          %3018 = vmatprep.subr.bf16.mxu0 %v2703
          %3019 = vmatpush2.bf16.msra.mxu0 %v2702
          %3020 = vmatprep.subr.bf16.mxu0 %v2701
          %3021 = vmatpush2.bf16.msra.mxu0 %v2700
          %3022 = vmatprep.subr.bf16.mxu0 %v2699
          %3023 = vmatpush2.bf16.msra.mxu0 %v2698
          %3024 = vmatprep.subr.bf16.mxu0 %v2697
          %3025 = vmatpush2.bf16.msra.mxu0 %v2696
          %3026 = vmatprep.subr.bf16.mxu0 %v2695
          %3027 = vmatpush2.bf16.msra.mxu0 %v2694
          %3028 = vmatprep.subr.bf16.mxu0 %v2693
          %3029 = vmatpush2.bf16.msra.mxu0 %v2692
          %3030 = vmatprep.mubr.bf16.mxu0 %v1995
          %3031 = vmatmul.mubr.bf16.gmra.mxu0 %v1994
          %v3032 = vpop.f32.mrf.mxu0
          %v3033 = vadd.f32 %v2992, %v3032
          %v3034 = vpop.f32.mrf.mxu0
          %v3035 = vadd.f32 %v2994, %v3034
          %v3036 = vpop.f32.mrf.mxu0
          %v3037 = vpop.f32.mrf.mxu0
          %3038 = vdwg.mxu0
          %3039 = vmatprep.subr.bf16.mxu0 %v2723
          %3040 = vmatpush1.bf16.msra.mxu0 %v2722
          %3041 = vmatprep.subr.bf16.mxu0 %v2721
          %3042 = vmatpush1.bf16.msra.mxu0 %v2720
          %3043 = vmatprep.subr.bf16.mxu0 %v2719
          %3044 = vmatpush1.bf16.msra.mxu0 %v2718
          %3045 = vmatprep.subr.bf16.mxu0 %v2717
          %3046 = vmatpush1.bf16.msra.mxu0 %v2716
          %3047 = vmatprep.subr.bf16.mxu0 %v2715
          %3048 = vmatpush1.bf16.msra.mxu0 %v2714
          %3049 = vmatprep.subr.bf16.mxu0 %v2713
          %3050 = vmatpush1.bf16.msra.mxu0 %v2712
          %3051 = vmatprep.subr.bf16.mxu0 %v2711
          %3052 = vmatpush1.bf16.msra.mxu0 %v2710
          %3053 = vmatprep.subr.bf16.mxu0 %v2709
          %3054 = vmatpush1.bf16.msra.mxu0 %v2708
          %3055 = vmatprep.subr.bf16.mxu0 %v2739
          %3056 = vmatpush2.bf16.msra.mxu0 %v2738
          %3057 = vmatprep.subr.bf16.mxu0 %v2737
          %3058 = vmatpush2.bf16.msra.mxu0 %v2736
          %3059 = vmatprep.subr.bf16.mxu0 %v2735
          %3060 = vmatpush2.bf16.msra.mxu0 %v2734
          %3061 = vmatprep.subr.bf16.mxu0 %v2733
          %3062 = vmatpush2.bf16.msra.mxu0 %v2732
          %3063 = vmatprep.subr.bf16.mxu0 %v2731
          %3064 = vmatpush2.bf16.msra.mxu0 %v2730
          %3065 = vmatprep.subr.bf16.mxu0 %v2729
          %3066 = vmatpush2.bf16.msra.mxu0 %v2728
          %3067 = vmatprep.subr.bf16.mxu0 %v2727
          %3068 = vmatpush2.bf16.msra.mxu0 %v2726
          %3069 = vmatprep.subr.bf16.mxu0 %v2725
          %3070 = vmatpush2.bf16.msra.mxu0 %v2724
          %3071 = vmatprep.mubr.bf16.mxu0 %v1997
          %3072 = vmatmul.mubr.bf16.gmra.mxu0 %v1996
          %v3073 = vpop.f32.mrf.mxu0
          %v3074 = vadd.f32 %v3033, %v3073
          %v3075 = vpop.f32.mrf.mxu0
          %v3076 = vadd.f32 %v3035, %v3075
          %v3077 = vpop.f32.mrf.mxu0
          %v3078 = vpop.f32.mrf.mxu0
          %3079 = vdwg.mxu0
          %3080 = vmatprep.subr.bf16.mxu0 %v2755
          %3081 = vmatpush1.bf16.msra.mxu0 %v2754
          %3082 = vmatprep.subr.bf16.mxu0 %v2753
          %3083 = vmatpush1.bf16.msra.mxu0 %v2752
          %3084 = vmatprep.subr.bf16.mxu0 %v2751
          %3085 = vmatpush1.bf16.msra.mxu0 %v2750
          %3086 = vmatprep.subr.bf16.mxu0 %v2749
          %3087 = vmatpush1.bf16.msra.mxu0 %v2748
          %3088 = vmatprep.subr.bf16.mxu0 %v2747
          %3089 = vmatpush1.bf16.msra.mxu0 %v2746
          %3090 = vmatprep.subr.bf16.mxu0 %v2745
          %3091 = vmatpush1.bf16.msra.mxu0 %v2744
          %3092 = vmatprep.subr.bf16.mxu0 %v2743
          %3093 = vmatpush1.bf16.msra.mxu0 %v2742
          %3094 = vmatprep.subr.bf16.mxu0 %v2741
          %3095 = vmatpush1.bf16.msra.mxu0 %v2740
          %3096 = vmatprep.subr.bf16.mxu0 0
          %3097 = vmatpush2.bf16.msra.mxu0 0
          %3098 = vmatprep.subr.bf16.mxu0 0
          %3099 = vmatpush2.bf16.msra.mxu0 0
          %3100 = vmatprep.subr.bf16.mxu0 0
          %3101 = vmatpush2.bf16.msra.mxu0 0
          %3102 = vmatprep.subr.bf16.mxu0 0
          %3103 = vmatpush2.bf16.msra.mxu0 0
          %3104 = vmatprep.subr.bf16.mxu0 0
          %3105 = vmatpush2.bf16.msra.mxu0 0
          %3106 = vmatprep.subr.bf16.mxu0 %v2761
          %3107 = vmatpush2.bf16.msra.mxu0 %v2760
          %3108 = vmatprep.subr.bf16.mxu0 %v2759
          %3109 = vmatpush2.bf16.msra.mxu0 %v2758
          %3110 = vmatprep.subr.bf16.mxu0 %v2757
          %3111 = vmatpush2.bf16.msra.mxu0 %v2756
          %3112 = vmatprep.mubr.bf16.mxu0 %v2914
          %3113 = vmatmul.mubr.bf16.gmra.mxu0 %v1998
          %v3114 = vpop.f32.mrf.mxu0
          %v3115 = vadd.f32 %v3074, %v3114
          %v3116 = vpop.f32.mrf.mxu0
          %v3117 = vadd.f32 %v3076, %v3116
          %v3118 = vpop.f32.mrf.mxu0
          %v3119 = vpop.f32.mrf.mxu0
          %3120 = vdwg.mxu0
          %v3123 = vcombine.low %v3115, %v3117
          %v3125 = vunpack.c.l.s4 1983009808
          %v3126 = vunpack.c.0.s8 %v3125
          %v3127 = vlaneseq
          %v3128 = vshrl.u32 %v3127, 7
          %v3129 = vsub.s32 %v3126, %v3128
          %v3130 = vrot.slane %v3123, %v3129
          %vm3132 = vcmask 519170
          %vm3133 = vmor %vm3132, %vm535
          %3134 = vst.msk [vmem:[#allocation4] sm:$0xf] %vm3133, %v3130
        $region94: #{tpu_custom_call.1} parent=81 // pred_fallthru
          _
        // Predicated region
        $region95: #{tpu_custom_call.1} parent=81 // pred_check
          %p3135 = pneg %p216
        $region96: #{tpu_custom_call.1} parent=81 // pred_check_branch
          %3137 = sbr.rel (%p3135) target = $region98
        $region97: #{tpu_custom_call.1} parent=81 // pred_region
          %s3139 = ssub.s32 64, 64
          %3140 = vsyncadd [#allocation5], %s3139
          %s3141 = smul.addr %s23, 2
          %s3142 = smul.addr %s3141, 32
          %s3143 = scalar_lea.hbm %s7, %s3142
          %s3145 = sshll.u32 [#allocation4], 4
          %s3146 = int_to_ptr.vmem [resolvable:$true] %s3145
          %3148 = dma.vmem_to_hbm [thread:$0]  %s3146, 64, %s3143, [#allocation5]
        $region98: #{tpu_custom_call.1} parent=81 // pred_fallthru
          _
        // Predicated region
        $region99: #{tpu_custom_call.1} parent=81 // pred_check
          %p3149 = pneg %p216
        $region100: #{tpu_custom_call.1} parent=81 // pred_check_branch
          %3151 = sbr.rel (%p3149) target = $region102
        $region101: #{tpu_custom_call.1} parent=81 // pred_region
          %3152 = dma.done [#allocation5], 64
        $region102: #{tpu_custom_call.1} parent=81 // pred_fallthru
          _
      $region82: #{tpu_custom_call.1} parent=5 // pred_fallthru
        _
      %p3153 = scmp.le.s32.totalorder 2, %s14
      // Predicated region
      $region103: #{tpu_custom_call.1} parent=5 // pred_check
        %p3154 = pneg %p3153
      $region104: #{tpu_custom_call.1} parent=5 // pred_check_branch
        %3156 = sbr.rel (%p3154) target = $region106
      $region105: #{tpu_custom_call.1} parent=5 // pred_region
        %s3157 = ssub.s32 %s14, 2
      $region106: #{tpu_custom_call.1} parent=5 // pred_fallthru
        _
    $region6: #{tpu_custom_call.1} parent=1 // loop_footer
      %s18 = sadd.s32 1, %s14
    $region7: #{tpu_custom_call.1} parent=1 // loop_footer_branch
      %13 = sbr.rel target = $region3
    $region8: #{tpu_custom_call.1} parent=1 // loop_exit
      _
    %3158 = vsyncpa [#allocation5], 1
    %s3159 = scalar_lea.sflag [#allocation5], 1
    %3160 = vsyncpa %s3159, 1

</llo_original>
